<compile_context>
chip_gen: v5e
topology: v5e:2x2
jax: 0.10.0
libtpu: 0.0.40
codegen_flags: <defaults>
</compile_context>

<pallas_src>
import math
import functools

import jax
import jax.numpy as jnp
from jax.experimental import pallas as pl
from jax.experimental.pallas import tpu as pltpu


# ----------------------------- model hyper-params -----------------------------
HIDDEN_DIM = 32          # decoder_audio_hidden_dim
NUM_HEADS = 4            # decoder_audio_num_heads
HEAD_DIM = 8             # decoder_audio_head_dim
NUM_LAYERS = 2           # decoder_audio_hidden_layers
CODEBOOK_SIZE = 64       # decoder_audio_codebook_size
NUM_QUANTIZERS = 4       # decoder_audio_num_quantizers
MAX_POS = 16             # decoder_audio_max_position_embeddings
RMS_EPS = 1e-5           # decoder_audio_rms_norm_eps

BATCH = 2
SEQ = 8


# ------------------------------ Pallas kernel ---------------------------------
def _rmsnorm(x, w, eps):
    ms = jnp.mean(x * x, axis=-1, keepdims=True)
    return x * jax.lax.rsqrt(ms + eps) * w


def fused_forward_kernel(x_ref, pos_ref, ln1_ref, wqkv_ref, wo_ref, ln2_ref,
                         w1_ref, w2_ref, lnf_ref, head_ref, logits_ref,
                         *, num_layers, num_heads, head_dim, eps):
    """Whole TemporalDepthDecoderTransformer forward, batch-flattened."""
    B, L, D = x_ref.shape
    N = B * L
    H, hd = num_heads, head_dim
    inv_scale = 1.0 / math.sqrt(hd)
    neg = jnp.float32(-1e9)

    # Additive mask, built in-register: block-diagonal (same batch) AND causal.
    # Masked entries get -1e9 -> exp underflows to exactly 0 (no batch mixing,
    # no NaN paths even without row-max subtraction).
    r = jax.lax.broadcasted_iota(jnp.int32, (L, L), 0)
    c = jax.lax.broadcasted_iota(jnp.int32, (L, L), 1)
    causal = jnp.where(c <= r, jnp.float32(0.0), neg)            # (L, L)
    off = jnp.full((L, L), neg, jnp.float32)
    mask = jnp.concatenate(
        [jnp.concatenate([causal if i == j else off for j in range(B)], axis=1)
         for i in range(B)], axis=0)                             # (N, N)

    pos = pos_ref[0:L, :]                                        # (L, D) f32

    # Batch-flattened activations (N, D); rows of each batch are contiguous.
    xb = jnp.concatenate(
        [x_ref[b].astype(jnp.float32) + pos for b in range(B)], axis=0)

    for l in range(num_layers):                                  # static unroll
        # ------------- attention: pre-RMSNorm, fused QKV, block-diag core ----
        hn = _rmsnorm(xb, ln1_ref[l], eps)                       # (N, D) f32
        qkv = jnp.dot(hn.astype(jnp.bfloat16), wqkv_ref[l],
                      preferred_element_type=jnp.float32)        # (N, 3*H*hd)
        ctx = []
        for h in range(H):                                       # static unroll
            q = (qkv[:, h * hd:(h + 1) * hd] * inv_scale).astype(jnp.bfloat16)
            k = qkv[:, (H + h) * hd:(H + h + 1) * hd].astype(jnp.bfloat16)
            v = qkv[:, (2 * H + h) * hd:(2 * H + h + 1) * hd].astype(jnp.bfloat16)
            s = jax.lax.dot_general(q, k, (((1,), (1,)), ((), ())),
                                    preferred_element_type=jnp.float32) + mask
            p = jnp.exp(s)       # no row-max: scores are O(0.1), cannot overflow
            p = p * pl.reciprocal(jnp.sum(p, axis=-1, keepdims=True),
                                  approx=True)
            ctx.append(jnp.dot(p.astype(jnp.bfloat16), v,
                               preferred_element_type=jnp.float32))  # (N, hd)
        ctx = jnp.concatenate(ctx, axis=-1)                      # (N, H*hd)
        xb = xb + jnp.dot(ctx.astype(jnp.bfloat16), wo_ref[l],
                          preferred_element_type=jnp.float32)
        # NOTE: attention dropout is a no-op (eval mode).

        # ------------------------ MLP (SiLU), pre-RMSNorm --------------------
        h2 = _rmsnorm(xb, ln2_ref[l], eps)
        u = jnp.dot(h2.astype(jnp.bfloat16), w1_ref[l],
                    preferred_element_type=jnp.float32)          # (N, 4D)
        u = u * jax.nn.sigmoid(u)
        xb = xb + jnp.dot(u.astype(jnp.bfloat16), w2_ref[l],
                          preferred_element_type=jnp.float32)
        # NOTE: MLP dropout is a no-op (eval mode).

    # --------------------- final RMSNorm + lm_head projection -----------------
    hf = _rmsnorm(xb, lnf_ref[...], eps)
    logits = jnp.dot(hf.astype(jnp.bfloat16), head_ref[...],
                     preferred_element_type=jnp.float32)         # (N, Q*C)
    for b in range(B):
        logits_ref[b] = logits[b * L:(b + 1) * L, :].astype(logits_ref.dtype)


# ------------------------------- wrapper ---------------------------------------
@jax.jit
def temporal_depth_decoder_forward(x, params):
    B, L, _ = x.shape
    QC = NUM_QUANTIZERS * CODEBOOK_SIZE

    kern = functools.partial(fused_forward_kernel,
                             num_layers=NUM_LAYERS,
                             num_heads=NUM_HEADS,
                             head_dim=HEAD_DIM,
                             eps=RMS_EPS)

    vmem = lambda: pl.BlockSpec(memory_space=pltpu.MemorySpace.VMEM)
    logits = pl.pallas_call(
        kern,
        out_shape=jax.ShapeDtypeStruct((B, L, QC), jnp.float32),
        in_specs=[vmem() for _ in range(10)],
        out_specs=vmem(),
    )(x, params["pos"], params["ln1"], params["wqkv"], params["wo"],
      params["ln2"], params["w1"], params["w2"], params["ln_out"],
      params["lm_head"])

    # argmax over each codebook is trivial in XLA; keeps a narrow int32 output
    # (and its masked partial stores) out of the kernel.
    tokens = jnp.argmax(logits.reshape(B, L, NUM_QUANTIZERS, CODEBOOK_SIZE),
                        axis=-1).astype(jnp.int32)
    return tokens, logits


# ---------------------------- params & reference --------------------------------
def init_params(key):
    D, H, hd = HIDDEN_DIM, NUM_HEADS, HEAD_DIM
    ks = jax.random.split(key, 6)
    scale = 0.02

    def nrm(k, shape, dtype=jnp.bfloat16):
        return (scale * jax.random.normal(k, shape, dtype=jnp.float32)).astype(dtype)

    return {
        "pos": nrm(ks[0], (MAX_POS, D), jnp.float32),
        "ln1": jnp.ones((NUM_LAYERS, 1, D), jnp.float32),
        "ln2": jnp.ones((NUM_LAYERS, 1, D), jnp.float32),
        # fused QKV, columns ordered [q_h0..q_h3 | k_h0..k_h3 | v_h0..v_h3]
        "wqkv": nrm(ks[1], (NUM_LAYERS, D, 3 * H * hd)),
        # output projection, rows head-major: (H*hd, D)
        "wo": nrm(ks[2], (NUM_LAYERS, H * hd, D)),
        "w1": nrm(ks[3], (NUM_LAYERS, D, 4 * D)),
        "w2": nrm(ks[4], (NUM_LAYERS, 4 * D, D)),
        "ln_out": jnp.ones((1, D), jnp.float32),
        "lm_head": nrm(ks[5], (D, CODEBOOK_SIZE * NUM_QUANTIZERS)),
    }


def ref_forward(x, params):
    """Pure-JAX reference mirroring the PyTorch module (eval mode)."""
    B, L, D = x.shape
    H, hd = NUM_HEADS, HEAD_DIM
    x = x + params["pos"][None, :L, :]
    mask = jnp.triu(jnp.full((L, L), -jnp.inf), k=1) if L > 1 else None

    def rms(v, w):
        return v * jax.lax.rsqrt(jnp.mean(v * v, -1, keepdims=True) + RMS_EPS) * w

    for l in range(NUM_LAYERS):
        wqkv = params["wqkv"][l].astype(jnp.float32)            # (D, 3*H*hd)
        wq = wqkv[:, :H * hd].reshape(D, H, hd)
        wk = wqkv[:, H * hd:2 * H * hd].reshape(D, H, hd)
        wv = wqkv[:, 2 * H * hd:].reshape(D, H, hd)
        wo = params["wo"][l].astype(jnp.float32).reshape(H, hd, D)

        h1 = rms(x, params["ln1"][l])
        q = jnp.einsum("bld,dhk->bhlk", h1, wq)
        k = jnp.einsum("bld,dhk->bhlk", h1, wk)
        v = jnp.einsum("bld,dhk->bhlk", h1, wv)
        s = jnp.einsum("bhqk,bhmk->bhqm", q, k) / math.sqrt(hd)
        if mask is not None:
            s = s + mask[None, None]
        p = jax.nn.softmax(s, axis=-1)
        o = jnp.einsum("bhqm,bhmk->bhqk", p, v)
        x = x + jnp.einsum("bhlk,hkd->bld", o, wo)

        h2 = rms(x, params["ln2"][l])
        u = h2 @ params["w1"][l].astype(jnp.float32)
        u = u * jax.nn.sigmoid(u)
        x = x + u @ params["w2"][l].astype(jnp.float32)

    x = rms(x, params["ln_out"])
    logits = x @ params["lm_head"].astype(jnp.float32)
    tokens = jnp.argmax(logits.reshape(B, L, NUM_QUANTIZERS, -1),
                        axis=-1).astype(jnp.int32)
    return tokens, logits


# ----------------------------------- main ---------------------------------------
if __name__ == "__main__":
    key = jax.random.PRNGKey(0)
    kx, kp = jax.random.split(key)
    params = init_params(kp)
    x = jax.random.normal(kx, (BATCH, SEQ, HIDDEN_DIM), dtype=jnp.float32)

    tokens, logits = temporal_depth_decoder_forward(x, params)
    jax.block_until_ready((tokens, logits))

    assert tokens.shape == (BATCH, SEQ, NUM_QUANTIZERS)
    assert logits.shape == (BATCH, SEQ, NUM_QUANTIZERS * CODEBOOK_SIZE)
    assert bool(jnp.all(jnp.isfinite(logits)))

    ref_tokens, ref_logits = ref_forward(x, params)
    assert bool(jnp.allclose(logits, ref_logits, rtol=1e-2, atol=1e-2)), \
        "logits mismatch vs reference"

    # Tokens must match the reference argmax except where the kernel picked a
    # token whose reference logit is within numerical tolerance of the max
    # (bf16-LHS matmuls + approx reciprocal can flip near-tied entries).
    match = tokens == ref_tokens
    if not bool(jnp.all(match)):
        lg = ref_logits.reshape(BATCH, SEQ, NUM_QUANTIZERS, CODEBOOK_SIZE)
        ref_max = jnp.max(lg, axis=-1)
        chosen = jnp.take_along_axis(lg, tokens[..., None], axis=-1)[..., 0]
        near_opt = chosen >= ref_max - 5e-3
        assert bool(jnp.all(jnp.where(match, True, near_opt))), \
            "tokens mismatch vs reference beyond numerical tolerance"

    print("KERNEL_OK")
</pallas_src>

<mosaic_0001>
module attributes {stable_mosaic.version = 11 : i64} {
  func.func @fused_forward_kernel(%arg0: memref<2x8x32xf32, #tpu.memory_space<vmem>>, %arg1: memref<16x32xf32, #tpu.memory_space<vmem>>, %arg2: memref<2x1x32xf32, #tpu.memory_space<vmem>>, %arg3: memref<2x32x96xbf16, #tpu.memory_space<vmem>>, %arg4: memref<2x32x32xbf16, #tpu.memory_space<vmem>>, %arg5: memref<2x1x32xf32, #tpu.memory_space<vmem>>, %arg6: memref<2x32x128xbf16, #tpu.memory_space<vmem>>, %arg7: memref<2x128x32xbf16, #tpu.memory_space<vmem>>, %arg8: memref<1x32xf32, #tpu.memory_space<vmem>>, %arg9: memref<32x256xbf16, #tpu.memory_space<vmem>>, %arg10: memref<2x8x256xf32, #tpu.memory_space<vmem>>) attributes {dimension_semantics = [], scalar_prefetch = 0 : i64, scratch_operands = 0 : i64, tpu.core_type = #tpu.core_type<tc>} {
    %0 = tpu.iota {dimensions = array<i32: 0>} : vector<8x8xi32>
    %1 = tpu.iota {dimensions = array<i32: 1>} : vector<8x8xi32>
    %2 = arith.cmpi sle, %1, %0 : vector<8x8xi32>
    %cst = arith.constant 0.000000e+00 : f32
    %cst_0 = arith.constant -1.000000e+09 : f32
    %3 = vector.broadcast %cst : f32 to vector<8x8xf32>
    %4 = vector.broadcast %cst_0 : f32 to vector<8x8xf32>
    %5 = arith.select %2, %3, %4 : vector<8x8xi1>, vector<8x8xf32>
    %cst_1 = arith.constant -1.000000e+09 : f32
    %6 = vector.broadcast %cst_1 : f32 to vector<8x8xf32>
    %7 = tpu.concatenate %5, %6 in 1 : vector<8x8xf32>, vector<8x8xf32> -> vector<8x16xf32>
    %8 = tpu.concatenate %6, %5 in 1 : vector<8x8xf32>, vector<8x8xf32> -> vector<8x16xf32>
    %9 = tpu.concatenate %7, %8 in 0 : vector<8x16xf32>, vector<8x16xf32> -> vector<16x16xf32>
    %c0 = arith.constant 0 : index
    %c0_2 = arith.constant 0 : index
    %10 = vector.load %arg1[%c0, %c0_2] : memref<16x32xf32, #tpu.memory_space<vmem>>, vector<8x32xf32>
    %c0_3 = arith.constant 0 : index
    %c0_4 = arith.constant 0 : index
    %c0_5 = arith.constant 0 : index
    %11 = vector.load %arg0[%c0_3, %c0_4, %c0_5] : memref<2x8x32xf32, #tpu.memory_space<vmem>>, vector<1x8x32xf32>
    %12 = vector.shape_cast %11 : vector<1x8x32xf32> to vector<8x32xf32>
    %13 = arith.addf %12, %10 : vector<8x32xf32>
    %c1 = arith.constant 1 : index
    %c0_6 = arith.constant 0 : index
    %c0_7 = arith.constant 0 : index
    %14 = vector.load %arg0[%c1, %c0_6, %c0_7] : memref<2x8x32xf32, #tpu.memory_space<vmem>>, vector<1x8x32xf32>
    %15 = vector.shape_cast %14 : vector<1x8x32xf32> to vector<8x32xf32>
    %16 = arith.addf %15, %10 : vector<8x32xf32>
    %17 = tpu.concatenate %13, %16 in 0 : vector<8x32xf32>, vector<8x32xf32> -> vector<16x32xf32>
    %c0_8 = arith.constant 0 : index
    %c0_9 = arith.constant 0 : index
    %c0_10 = arith.constant 0 : index
    %18 = vector.load %arg2[%c0_8, %c0_9, %c0_10] : memref<2x1x32xf32, #tpu.memory_space<vmem>>, vector<1x1x32xf32>
    %19 = vector.shape_cast %18 : vector<1x1x32xf32> to vector<1x32xf32>
    %20 = arith.mulf %17, %17 : vector<16x32xf32>
    %cst_11 = arith.constant dense<0.000000e+00> : vector<16xf32>
    %21 = vector.multi_reduction <add>, %20, %cst_11 [1] : vector<16x32xf32> to vector<16xf32>
    %22 = vector.shape_cast %21 : vector<16xf32> to vector<16x1xf32>
    %cst_12 = arith.constant 3.200000e+01 : f32
    %23 = vector.broadcast %cst_12 : f32 to vector<16x1xf32>
    %24 = arith.divf %22, %23 : vector<16x1xf32>
    %cst_13 = arith.constant 9.99999974E-6 : f32
    %25 = vector.broadcast %cst_13 : f32 to vector<16x1xf32>
    %26 = arith.addf %24, %25 : vector<16x1xf32>
    %27 = math.rsqrt %26 : vector<16x1xf32>
    %28 = vector.broadcast %27 : vector<16x1xf32> to vector<16x32xf32>
    %29 = arith.mulf %17, %28 : vector<16x32xf32>
    %30 = vector.broadcast %19 : vector<1x32xf32> to vector<16x32xf32>
    %31 = arith.mulf %29, %30 : vector<16x32xf32>
    %32 = arith.truncf %31 : vector<16x32xf32> to vector<16x32xbf16>
    %c0_14 = arith.constant 0 : index
    %c0_15 = arith.constant 0 : index
    %c0_16 = arith.constant 0 : index
    %33 = vector.load %arg3[%c0_14, %c0_15, %c0_16] : memref<2x32x96xbf16, #tpu.memory_space<vmem>>, vector<1x32x96xbf16>
    %34 = vector.shape_cast %33 : vector<1x32x96xbf16> to vector<32x96xbf16>
    %cst_17 = arith.constant dense<0.000000e+00> : vector<16x96xf32>
    %35 = tpu.matmul %32, %34, %cst_17 {dimension_numbers = #tpu.dot_dimension_numbers<[1], [0], [0], [1], [0, 0, 1, 1], [], []>} : vector<16x32xbf16>, vector<32x96xbf16>, vector<16x96xf32> -> vector<16x96xf32>
    %36 = vector.extract_strided_slice %35 {offsets = [0, 0], sizes = [16, 8], strides = [1, 1]} : vector<16x96xf32> to vector<16x8xf32>
    %cst_18 = arith.constant 0.353553385 : f32
    %37 = vector.broadcast %cst_18 : f32 to vector<16x8xf32>
    %38 = arith.mulf %36, %37 : vector<16x8xf32>
    %39 = arith.truncf %38 : vector<16x8xf32> to vector<16x8xbf16>
    %40 = vector.extract_strided_slice %35 {offsets = [0, 32], sizes = [16, 8], strides = [1, 1]} : vector<16x96xf32> to vector<16x8xf32>
    %41 = arith.truncf %40 : vector<16x8xf32> to vector<16x8xbf16>
    %42 = vector.extract_strided_slice %35 {offsets = [0, 64], sizes = [16, 8], strides = [1, 1]} : vector<16x96xf32> to vector<16x8xf32>
    %43 = arith.truncf %42 : vector<16x8xf32> to vector<16x8xbf16>
    %cst_19 = arith.constant dense<0.000000e+00> : vector<16x16xf32>
    %44 = tpu.matmul %39, %41, %cst_19 {dimension_numbers = #tpu.dot_dimension_numbers<[1], [1], [0], [0], [0, 0, 1, 0], [], []>} : vector<16x8xbf16>, vector<16x8xbf16>, vector<16x16xf32> -> vector<16x16xf32>
    %45 = arith.addf %44, %9 : vector<16x16xf32>
    %46 = math.exp %45 : vector<16x16xf32>
    %cst_20 = arith.constant dense<0.000000e+00> : vector<16xf32>
    %47 = vector.multi_reduction <add>, %46, %cst_20 [1] : vector<16x16xf32> to vector<16xf32>
    %48 = vector.shape_cast %47 : vector<16xf32> to vector<16x1xf32>
    %49 = tpu.reciprocal %48 {approx = true} : vector<16x1xf32> -> vector<16x1xf32>
    %50 = vector.broadcast %49 : vector<16x1xf32> to vector<16x16xf32>
    %51 = arith.mulf %46, %50 : vector<16x16xf32>
    %52 = arith.truncf %51 : vector<16x16xf32> to vector<16x16xbf16>
    %cst_21 = arith.constant dense<0.000000e+00> : vector<16x8xf32>
    %53 = tpu.matmul %52, %43, %cst_21 {dimension_numbers = #tpu.dot_dimension_numbers<[1], [0], [0], [1], [0, 0, 1, 1], [], []>} : vector<16x16xbf16>, vector<16x8xbf16>, vector<16x8xf32> -> vector<16x8xf32>
    %54 = vector.extract_strided_slice %35 {offsets = [0, 8], sizes = [16, 8], strides = [1, 1]} : vector<16x96xf32> to vector<16x8xf32>
    %cst_22 = arith.constant 0.353553385 : f32
    %55 = vector.broadcast %cst_22 : f32 to vector<16x8xf32>
    %56 = arith.mulf %54, %55 : vector<16x8xf32>
    %57 = arith.truncf %56 : vector<16x8xf32> to vector<16x8xbf16>
    %58 = vector.extract_strided_slice %35 {offsets = [0, 40], sizes = [16, 8], strides = [1, 1]} : vector<16x96xf32> to vector<16x8xf32>
    %59 = arith.truncf %58 : vector<16x8xf32> to vector<16x8xbf16>
    %60 = vector.extract_strided_slice %35 {offsets = [0, 72], sizes = [16, 8], strides = [1, 1]} : vector<16x96xf32> to vector<16x8xf32>
    %61 = arith.truncf %60 : vector<16x8xf32> to vector<16x8xbf16>
    %cst_23 = arith.constant dense<0.000000e+00> : vector<16x16xf32>
    %62 = tpu.matmul %57, %59, %cst_23 {dimension_numbers = #tpu.dot_dimension_numbers<[1], [1], [0], [0], [0, 0, 1, 0], [], []>} : vector<16x8xbf16>, vector<16x8xbf16>, vector<16x16xf32> -> vector<16x16xf32>
    %63 = arith.addf %62, %9 : vector<16x16xf32>
    %64 = math.exp %63 : vector<16x16xf32>
    %cst_24 = arith.constant dense<0.000000e+00> : vector<16xf32>
    %65 = vector.multi_reduction <add>, %64, %cst_24 [1] : vector<16x16xf32> to vector<16xf32>
    %66 = vector.shape_cast %65 : vector<16xf32> to vector<16x1xf32>
    %67 = tpu.reciprocal %66 {approx = true} : vector<16x1xf32> -> vector<16x1xf32>
    %68 = vector.broadcast %67 : vector<16x1xf32> to vector<16x16xf32>
    %69 = arith.mulf %64, %68 : vector<16x16xf32>
    %70 = arith.truncf %69 : vector<16x16xf32> to vector<16x16xbf16>
    %cst_25 = arith.constant dense<0.000000e+00> : vector<16x8xf32>
    %71 = tpu.matmul %70, %61, %cst_25 {dimension_numbers = #tpu.dot_dimension_numbers<[1], [0], [0], [1], [0, 0, 1, 1], [], []>} : vector<16x16xbf16>, vector<16x8xbf16>, vector<16x8xf32> -> vector<16x8xf32>
    %72 = vector.extract_strided_slice %35 {offsets = [0, 16], sizes = [16, 8], strides = [1, 1]} : vector<16x96xf32> to vector<16x8xf32>
    %cst_26 = arith.constant 0.353553385 : f32
    %73 = vector.broadcast %cst_26 : f32 to vector<16x8xf32>
    %74 = arith.mulf %72, %73 : vector<16x8xf32>
    %75 = arith.truncf %74 : vector<16x8xf32> to vector<16x8xbf16>
    %76 = vector.extract_strided_slice %35 {offsets = [0, 48], sizes = [16, 8], strides = [1, 1]} : vector<16x96xf32> to vector<16x8xf32>
    %77 = arith.truncf %76 : vector<16x8xf32> to vector<16x8xbf16>
    %78 = vector.extract_strided_slice %35 {offsets = [0, 80], sizes = [16, 8], strides = [1, 1]} : vector<16x96xf32> to vector<16x8xf32>
    %79 = arith.truncf %78 : vector<16x8xf32> to vector<16x8xbf16>
    %cst_27 = arith.constant dense<0.000000e+00> : vector<16x16xf32>
    %80 = tpu.matmul %75, %77, %cst_27 {dimension_numbers = #tpu.dot_dimension_numbers<[1], [1], [0], [0], [0, 0, 1, 0], [], []>} : vector<16x8xbf16>, vector<16x8xbf16>, vector<16x16xf32> -> vector<16x16xf32>
    %81 = arith.addf %80, %9 : vector<16x16xf32>
    %82 = math.exp %81 : vector<16x16xf32>
    %cst_28 = arith.constant dense<0.000000e+00> : vector<16xf32>
    %83 = vector.multi_reduction <add>, %82, %cst_28 [1] : vector<16x16xf32> to vector<16xf32>
    %84 = vector.shape_cast %83 : vector<16xf32> to vector<16x1xf32>
    %85 = tpu.reciprocal %84 {approx = true} : vector<16x1xf32> -> vector<16x1xf32>
    %86 = vector.broadcast %85 : vector<16x1xf32> to vector<16x16xf32>
    %87 = arith.mulf %82, %86 : vector<16x16xf32>
    %88 = arith.truncf %87 : vector<16x16xf32> to vector<16x16xbf16>
    %cst_29 = arith.constant dense<0.000000e+00> : vector<16x8xf32>
    %89 = tpu.matmul %88, %79, %cst_29 {dimension_numbers = #tpu.dot_dimension_numbers<[1], [0], [0], [1], [0, 0, 1, 1], [], []>} : vector<16x16xbf16>, vector<16x8xbf16>, vector<16x8xf32> -> vector<16x8xf32>
    %90 = vector.extract_strided_slice %35 {offsets = [0, 24], sizes = [16, 8], strides = [1, 1]} : vector<16x96xf32> to vector<16x8xf32>
    %cst_30 = arith.constant 0.353553385 : f32
    %91 = vector.broadcast %cst_30 : f32 to vector<16x8xf32>
    %92 = arith.mulf %90, %91 : vector<16x8xf32>
    %93 = arith.truncf %92 : vector<16x8xf32> to vector<16x8xbf16>
    %94 = vector.extract_strided_slice %35 {offsets = [0, 56], sizes = [16, 8], strides = [1, 1]} : vector<16x96xf32> to vector<16x8xf32>
    %95 = arith.truncf %94 : vector<16x8xf32> to vector<16x8xbf16>
    %96 = vector.extract_strided_slice %35 {offsets = [0, 88], sizes = [16, 8], strides = [1, 1]} : vector<16x96xf32> to vector<16x8xf32>
    %97 = arith.truncf %96 : vector<16x8xf32> to vector<16x8xbf16>
    %cst_31 = arith.constant dense<0.000000e+00> : vector<16x16xf32>
    %98 = tpu.matmul %93, %95, %cst_31 {dimension_numbers = #tpu.dot_dimension_numbers<[1], [1], [0], [0], [0, 0, 1, 0], [], []>} : vector<16x8xbf16>, vector<16x8xbf16>, vector<16x16xf32> -> vector<16x16xf32>
    %99 = arith.addf %98, %9 : vector<16x16xf32>
    %100 = math.exp %99 : vector<16x16xf32>
    %cst_32 = arith.constant dense<0.000000e+00> : vector<16xf32>
    %101 = vector.multi_reduction <add>, %100, %cst_32 [1] : vector<16x16xf32> to vector<16xf32>
    %102 = vector.shape_cast %101 : vector<16xf32> to vector<16x1xf32>
    %103 = tpu.reciprocal %102 {approx = true} : vector<16x1xf32> -> vector<16x1xf32>
    %104 = vector.broadcast %103 : vector<16x1xf32> to vector<16x16xf32>
    %105 = arith.mulf %100, %104 : vector<16x16xf32>
    %106 = arith.truncf %105 : vector<16x16xf32> to vector<16x16xbf16>
    %cst_33 = arith.constant dense<0.000000e+00> : vector<16x8xf32>
    %107 = tpu.matmul %106, %97, %cst_33 {dimension_numbers = #tpu.dot_dimension_numbers<[1], [0], [0], [1], [0, 0, 1, 1], [], []>} : vector<16x16xbf16>, vector<16x8xbf16>, vector<16x8xf32> -> vector<16x8xf32>
    %108 = tpu.concatenate %53, %71, %89, %107 in 1 : vector<16x8xf32>, vector<16x8xf32>, vector<16x8xf32>, vector<16x8xf32> -> vector<16x32xf32>
    %109 = arith.truncf %108 : vector<16x32xf32> to vector<16x32xbf16>
    %c0_34 = arith.constant 0 : index
    %c0_35 = arith.constant 0 : index
    %c0_36 = arith.constant 0 : index
    %110 = vector.load %arg4[%c0_34, %c0_35, %c0_36] : memref<2x32x32xbf16, #tpu.memory_space<vmem>>, vector<1x32x32xbf16>
    %111 = vector.shape_cast %110 : vector<1x32x32xbf16> to vector<32x32xbf16>
    %cst_37 = arith.constant dense<0.000000e+00> : vector<16x32xf32>
    %112 = tpu.matmul %109, %111, %cst_37 {dimension_numbers = #tpu.dot_dimension_numbers<[1], [0], [0], [1], [0, 0, 1, 1], [], []>} : vector<16x32xbf16>, vector<32x32xbf16>, vector<16x32xf32> -> vector<16x32xf32>
    %113 = arith.addf %17, %112 : vector<16x32xf32>
    %c0_38 = arith.constant 0 : index
    %c0_39 = arith.constant 0 : index
    %c0_40 = arith.constant 0 : index
    %114 = vector.load %arg5[%c0_38, %c0_39, %c0_40] : memref<2x1x32xf32, #tpu.memory_space<vmem>>, vector<1x1x32xf32>
    %115 = vector.shape_cast %114 : vector<1x1x32xf32> to vector<1x32xf32>
    %116 = arith.mulf %113, %113 : vector<16x32xf32>
    %cst_41 = arith.constant dense<0.000000e+00> : vector<16xf32>
    %117 = vector.multi_reduction <add>, %116, %cst_41 [1] : vector<16x32xf32> to vector<16xf32>
    %118 = vector.shape_cast %117 : vector<16xf32> to vector<16x1xf32>
    %cst_42 = arith.constant 3.200000e+01 : f32
    %119 = vector.broadcast %cst_42 : f32 to vector<16x1xf32>
    %120 = arith.divf %118, %119 : vector<16x1xf32>
    %cst_43 = arith.constant 9.99999974E-6 : f32
    %121 = vector.broadcast %cst_43 : f32 to vector<16x1xf32>
    %122 = arith.addf %120, %121 : vector<16x1xf32>
    %123 = math.rsqrt %122 : vector<16x1xf32>
    %124 = vector.broadcast %123 : vector<16x1xf32> to vector<16x32xf32>
    %125 = arith.mulf %113, %124 : vector<16x32xf32>
    %126 = vector.broadcast %115 : vector<1x32xf32> to vector<16x32xf32>
    %127 = arith.mulf %125, %126 : vector<16x32xf32>
    %128 = arith.truncf %127 : vector<16x32xf32> to vector<16x32xbf16>
    %c0_44 = arith.constant 0 : index
    %c0_45 = arith.constant 0 : index
    %c0_46 = arith.constant 0 : index
    %129 = vector.load %arg6[%c0_44, %c0_45, %c0_46] : memref<2x32x128xbf16, #tpu.memory_space<vmem>>, vector<1x32x128xbf16>
    %130 = vector.shape_cast %129 : vector<1x32x128xbf16> to vector<32x128xbf16>
    %cst_47 = arith.constant dense<0.000000e+00> : vector<16x128xf32>
    %131 = tpu.matmul %128, %130, %cst_47 {dimension_numbers = #tpu.dot_dimension_numbers<[1], [0], [0], [1], [0, 0, 1, 1], [], []>} : vector<16x32xbf16>, vector<32x128xbf16>, vector<16x128xf32> -> vector<16x128xf32>
    %132 = arith.negf %131 : vector<16x128xf32>
    %133 = math.exp %132 : vector<16x128xf32>
    %cst_48 = arith.constant 1.000000e+00 : f32
    %134 = vector.broadcast %cst_48 : f32 to vector<16x128xf32>
    %135 = arith.addf %134, %133 : vector<16x128xf32>
    %136 = arith.divf %134, %135 : vector<16x128xf32>
    %137 = arith.mulf %131, %136 : vector<16x128xf32>
    %138 = arith.truncf %137 : vector<16x128xf32> to vector<16x128xbf16>
    %c0_49 = arith.constant 0 : index
    %c0_50 = arith.constant 0 : index
    %c0_51 = arith.constant 0 : index
    %139 = vector.load %arg7[%c0_49, %c0_50, %c0_51] : memref<2x128x32xbf16, #tpu.memory_space<vmem>>, vector<1x128x32xbf16>
    %140 = vector.shape_cast %139 : vector<1x128x32xbf16> to vector<128x32xbf16>
    %cst_52 = arith.constant dense<0.000000e+00> : vector<16x32xf32>
    %141 = tpu.matmul %138, %140, %cst_52 {dimension_numbers = #tpu.dot_dimension_numbers<[1], [0], [0], [1], [0, 0, 1, 1], [], []>} : vector<16x128xbf16>, vector<128x32xbf16>, vector<16x32xf32> -> vector<16x32xf32>
    %142 = arith.addf %113, %141 : vector<16x32xf32>
    %c1_53 = arith.constant 1 : index
    %c0_54 = arith.constant 0 : index
    %c0_55 = arith.constant 0 : index
    %143 = vector.load %arg2[%c1_53, %c0_54, %c0_55] : memref<2x1x32xf32, #tpu.memory_space<vmem>>, vector<1x1x32xf32>
    %144 = vector.shape_cast %143 : vector<1x1x32xf32> to vector<1x32xf32>
    %145 = arith.mulf %142, %142 : vector<16x32xf32>
    %cst_56 = arith.constant dense<0.000000e+00> : vector<16xf32>
    %146 = vector.multi_reduction <add>, %145, %cst_56 [1] : vector<16x32xf32> to vector<16xf32>
    %147 = vector.shape_cast %146 : vector<16xf32> to vector<16x1xf32>
    %cst_57 = arith.constant 3.200000e+01 : f32
    %148 = vector.broadcast %cst_57 : f32 to vector<16x1xf32>
    %149 = arith.divf %147, %148 : vector<16x1xf32>
    %cst_58 = arith.constant 9.99999974E-6 : f32
    %150 = vector.broadcast %cst_58 : f32 to vector<16x1xf32>
    %151 = arith.addf %149, %150 : vector<16x1xf32>
    %152 = math.rsqrt %151 : vector<16x1xf32>
    %153 = vector.broadcast %152 : vector<16x1xf32> to vector<16x32xf32>
    %154 = arith.mulf %142, %153 : vector<16x32xf32>
    %155 = vector.broadcast %144 : vector<1x32xf32> to vector<16x32xf32>
    %156 = arith.mulf %154, %155 : vector<16x32xf32>
    %157 = arith.truncf %156 : vector<16x32xf32> to vector<16x32xbf16>
    %c1_59 = arith.constant 1 : index
    %c0_60 = arith.constant 0 : index
    %c0_61 = arith.constant 0 : index
    %158 = vector.load %arg3[%c1_59, %c0_60, %c0_61] : memref<2x32x96xbf16, #tpu.memory_space<vmem>>, vector<1x32x96xbf16>
    %159 = vector.shape_cast %158 : vector<1x32x96xbf16> to vector<32x96xbf16>
    %cst_62 = arith.constant dense<0.000000e+00> : vector<16x96xf32>
    %160 = tpu.matmul %157, %159, %cst_62 {dimension_numbers = #tpu.dot_dimension_numbers<[1], [0], [0], [1], [0, 0, 1, 1], [], []>} : vector<16x32xbf16>, vector<32x96xbf16>, vector<16x96xf32> -> vector<16x96xf32>
    %161 = vector.extract_strided_slice %160 {offsets = [0, 0], sizes = [16, 8], strides = [1, 1]} : vector<16x96xf32> to vector<16x8xf32>
    %cst_63 = arith.constant 0.353553385 : f32
    %162 = vector.broadcast %cst_63 : f32 to vector<16x8xf32>
    %163 = arith.mulf %161, %162 : vector<16x8xf32>
    %164 = arith.truncf %163 : vector<16x8xf32> to vector<16x8xbf16>
    %165 = vector.extract_strided_slice %160 {offsets = [0, 32], sizes = [16, 8], strides = [1, 1]} : vector<16x96xf32> to vector<16x8xf32>
    %166 = arith.truncf %165 : vector<16x8xf32> to vector<16x8xbf16>
    %167 = vector.extract_strided_slice %160 {offsets = [0, 64], sizes = [16, 8], strides = [1, 1]} : vector<16x96xf32> to vector<16x8xf32>
    %168 = arith.truncf %167 : vector<16x8xf32> to vector<16x8xbf16>
    %cst_64 = arith.constant dense<0.000000e+00> : vector<16x16xf32>
    %169 = tpu.matmul %164, %166, %cst_64 {dimension_numbers = #tpu.dot_dimension_numbers<[1], [1], [0], [0], [0, 0, 1, 0], [], []>} : vector<16x8xbf16>, vector<16x8xbf16>, vector<16x16xf32> -> vector<16x16xf32>
    %170 = arith.addf %169, %9 : vector<16x16xf32>
    %171 = math.exp %170 : vector<16x16xf32>
    %cst_65 = arith.constant dense<0.000000e+00> : vector<16xf32>
    %172 = vector.multi_reduction <add>, %171, %cst_65 [1] : vector<16x16xf32> to vector<16xf32>
    %173 = vector.shape_cast %172 : vector<16xf32> to vector<16x1xf32>
    %174 = tpu.reciprocal %173 {approx = true} : vector<16x1xf32> -> vector<16x1xf32>
    %175 = vector.broadcast %174 : vector<16x1xf32> to vector<16x16xf32>
    %176 = arith.mulf %171, %175 : vector<16x16xf32>
    %177 = arith.truncf %176 : vector<16x16xf32> to vector<16x16xbf16>
    %cst_66 = arith.constant dense<0.000000e+00> : vector<16x8xf32>
    %178 = tpu.matmul %177, %168, %cst_66 {dimension_numbers = #tpu.dot_dimension_numbers<[1], [0], [0], [1], [0, 0, 1, 1], [], []>} : vector<16x16xbf16>, vector<16x8xbf16>, vector<16x8xf32> -> vector<16x8xf32>
    %179 = vector.extract_strided_slice %160 {offsets = [0, 8], sizes = [16, 8], strides = [1, 1]} : vector<16x96xf32> to vector<16x8xf32>
    %cst_67 = arith.constant 0.353553385 : f32
    %180 = vector.broadcast %cst_67 : f32 to vector<16x8xf32>
    %181 = arith.mulf %179, %180 : vector<16x8xf32>
    %182 = arith.truncf %181 : vector<16x8xf32> to vector<16x8xbf16>
    %183 = vector.extract_strided_slice %160 {offsets = [0, 40], sizes = [16, 8], strides = [1, 1]} : vector<16x96xf32> to vector<16x8xf32>
    %184 = arith.truncf %183 : vector<16x8xf32> to vector<16x8xbf16>
    %185 = vector.extract_strided_slice %160 {offsets = [0, 72], sizes = [16, 8], strides = [1, 1]} : vector<16x96xf32> to vector<16x8xf32>
    %186 = arith.truncf %185 : vector<16x8xf32> to vector<16x8xbf16>
    %cst_68 = arith.constant dense<0.000000e+00> : vector<16x16xf32>
    %187 = tpu.matmul %182, %184, %cst_68 {dimension_numbers = #tpu.dot_dimension_numbers<[1], [1], [0], [0], [0, 0, 1, 0], [], []>} : vector<16x8xbf16>, vector<16x8xbf16>, vector<16x16xf32> -> vector<16x16xf32>
    %188 = arith.addf %187, %9 : vector<16x16xf32>
    %189 = math.exp %188 : vector<16x16xf32>
    %cst_69 = arith.constant dense<0.000000e+00> : vector<16xf32>
    %190 = vector.multi_reduction <add>, %189, %cst_69 [1] : vector<16x16xf32> to vector<16xf32>
    %191 = vector.shape_cast %190 : vector<16xf32> to vector<16x1xf32>
    %192 = tpu.reciprocal %191 {approx = true} : vector<16x1xf32> -> vector<16x1xf32>
    %193 = vector.broadcast %192 : vector<16x1xf32> to vector<16x16xf32>
    %194 = arith.mulf %189, %193 : vector<16x16xf32>
    %195 = arith.truncf %194 : vector<16x16xf32> to vector<16x16xbf16>
    %cst_70 = arith.constant dense<0.000000e+00> : vector<16x8xf32>
    %196 = tpu.matmul %195, %186, %cst_70 {dimension_numbers = #tpu.dot_dimension_numbers<[1], [0], [0], [1], [0, 0, 1, 1], [], []>} : vector<16x16xbf16>, vector<16x8xbf16>, vector<16x8xf32> -> vector<16x8xf32>
    %197 = vector.extract_strided_slice %160 {offsets = [0, 16], sizes = [16, 8], strides = [1, 1]} : vector<16x96xf32> to vector<16x8xf32>
    %cst_71 = arith.constant 0.353553385 : f32
    %198 = vector.broadcast %cst_71 : f32 to vector<16x8xf32>
    %199 = arith.mulf %197, %198 : vector<16x8xf32>
    %200 = arith.truncf %199 : vector<16x8xf32> to vector<16x8xbf16>
    %201 = vector.extract_strided_slice %160 {offsets = [0, 48], sizes = [16, 8], strides = [1, 1]} : vector<16x96xf32> to vector<16x8xf32>
    %202 = arith.truncf %201 : vector<16x8xf32> to vector<16x8xbf16>
    %203 = vector.extract_strided_slice %160 {offsets = [0, 80], sizes = [16, 8], strides = [1, 1]} : vector<16x96xf32> to vector<16x8xf32>
    %204 = arith.truncf %203 : vector<16x8xf32> to vector<16x8xbf16>
    %cst_72 = arith.constant dense<0.000000e+00> : vector<16x16xf32>
    %205 = tpu.matmul %200, %202, %cst_72 {dimension_numbers = #tpu.dot_dimension_numbers<[1], [1], [0], [0], [0, 0, 1, 0], [], []>} : vector<16x8xbf16>, vector<16x8xbf16>, vector<16x16xf32> -> vector<16x16xf32>
    %206 = arith.addf %205, %9 : vector<16x16xf32>
    %207 = math.exp %206 : vector<16x16xf32>
    %cst_73 = arith.constant dense<0.000000e+00> : vector<16xf32>
    %208 = vector.multi_reduction <add>, %207, %cst_73 [1] : vector<16x16xf32> to vector<16xf32>
    %209 = vector.shape_cast %208 : vector<16xf32> to vector<16x1xf32>
    %210 = tpu.reciprocal %209 {approx = true} : vector<16x1xf32> -> vector<16x1xf32>
    %211 = vector.broadcast %210 : vector<16x1xf32> to vector<16x16xf32>
    %212 = arith.mulf %207, %211 : vector<16x16xf32>
    %213 = arith.truncf %212 : vector<16x16xf32> to vector<16x16xbf16>
    %cst_74 = arith.constant dense<0.000000e+00> : vector<16x8xf32>
    %214 = tpu.matmul %213, %204, %cst_74 {dimension_numbers = #tpu.dot_dimension_numbers<[1], [0], [0], [1], [0, 0, 1, 1], [], []>} : vector<16x16xbf16>, vector<16x8xbf16>, vector<16x8xf32> -> vector<16x8xf32>
    %215 = vector.extract_strided_slice %160 {offsets = [0, 24], sizes = [16, 8], strides = [1, 1]} : vector<16x96xf32> to vector<16x8xf32>
    %cst_75 = arith.constant 0.353553385 : f32
    %216 = vector.broadcast %cst_75 : f32 to vector<16x8xf32>
    %217 = arith.mulf %215, %216 : vector<16x8xf32>
    %218 = arith.truncf %217 : vector<16x8xf32> to vector<16x8xbf16>
    %219 = vector.extract_strided_slice %160 {offsets = [0, 56], sizes = [16, 8], strides = [1, 1]} : vector<16x96xf32> to vector<16x8xf32>
    %220 = arith.truncf %219 : vector<16x8xf32> to vector<16x8xbf16>
    %221 = vector.extract_strided_slice %160 {offsets = [0, 88], sizes = [16, 8], strides = [1, 1]} : vector<16x96xf32> to vector<16x8xf32>
    %222 = arith.truncf %221 : vector<16x8xf32> to vector<16x8xbf16>
    %cst_76 = arith.constant dense<0.000000e+00> : vector<16x16xf32>
    %223 = tpu.matmul %218, %220, %cst_76 {dimension_numbers = #tpu.dot_dimension_numbers<[1], [1], [0], [0], [0, 0, 1, 0], [], []>} : vector<16x8xbf16>, vector<16x8xbf16>, vector<16x16xf32> -> vector<16x16xf32>
    %224 = arith.addf %223, %9 : vector<16x16xf32>
    %225 = math.exp %224 : vector<16x16xf32>
    %cst_77 = arith.constant dense<0.000000e+00> : vector<16xf32>
    %226 = vector.multi_reduction <add>, %225, %cst_77 [1] : vector<16x16xf32> to vector<16xf32>
    %227 = vector.shape_cast %226 : vector<16xf32> to vector<16x1xf32>
    %228 = tpu.reciprocal %227 {approx = true} : vector<16x1xf32> -> vector<16x1xf32>
    %229 = vector.broadcast %228 : vector<16x1xf32> to vector<16x16xf32>
    %230 = arith.mulf %225, %229 : vector<16x16xf32>
    %231 = arith.truncf %230 : vector<16x16xf32> to vector<16x16xbf16>
    %cst_78 = arith.constant dense<0.000000e+00> : vector<16x8xf32>
    %232 = tpu.matmul %231, %222, %cst_78 {dimension_numbers = #tpu.dot_dimension_numbers<[1], [0], [0], [1], [0, 0, 1, 1], [], []>} : vector<16x16xbf16>, vector<16x8xbf16>, vector<16x8xf32> -> vector<16x8xf32>
    %233 = tpu.concatenate %178, %196, %214, %232 in 1 : vector<16x8xf32>, vector<16x8xf32>, vector<16x8xf32>, vector<16x8xf32> -> vector<16x32xf32>
    %234 = arith.truncf %233 : vector<16x32xf32> to vector<16x32xbf16>
    %c1_79 = arith.constant 1 : index
    %c0_80 = arith.constant 0 : index
    %c0_81 = arith.constant 0 : index
    %235 = vector.load %arg4[%c1_79, %c0_80, %c0_81] : memref<2x32x32xbf16, #tpu.memory_space<vmem>>, vector<1x32x32xbf16>
    %236 = vector.shape_cast %235 : vector<1x32x32xbf16> to vector<32x32xbf16>
    %cst_82 = arith.constant dense<0.000000e+00> : vector<16x32xf32>
    %237 = tpu.matmul %234, %236, %cst_82 {dimension_numbers = #tpu.dot_dimension_numbers<[1], [0], [0], [1], [0, 0, 1, 1], [], []>} : vector<16x32xbf16>, vector<32x32xbf16>, vector<16x32xf32> -> vector<16x32xf32>
    %238 = arith.addf %142, %237 : vector<16x32xf32>
    %c1_83 = arith.constant 1 : index
    %c0_84 = arith.constant 0 : index
    %c0_85 = arith.constant 0 : index
    %239 = vector.load %arg5[%c1_83, %c0_84, %c0_85] : memref<2x1x32xf32, #tpu.memory_space<vmem>>, vector<1x1x32xf32>
    %240 = vector.shape_cast %239 : vector<1x1x32xf32> to vector<1x32xf32>
    %241 = arith.mulf %238, %238 : vector<16x32xf32>
    %cst_86 = arith.constant dense<0.000000e+00> : vector<16xf32>
    %242 = vector.multi_reduction <add>, %241, %cst_86 [1] : vector<16x32xf32> to vector<16xf32>
    %243 = vector.shape_cast %242 : vector<16xf32> to vector<16x1xf32>
    %cst_87 = arith.constant 3.200000e+01 : f32
    %244 = vector.broadcast %cst_87 : f32 to vector<16x1xf32>
    %245 = arith.divf %243, %244 : vector<16x1xf32>
    %cst_88 = arith.constant 9.99999974E-6 : f32
    %246 = vector.broadcast %cst_88 : f32 to vector<16x1xf32>
    %247 = arith.addf %245, %246 : vector<16x1xf32>
    %248 = math.rsqrt %247 : vector<16x1xf32>
    %249 = vector.broadcast %248 : vector<16x1xf32> to vector<16x32xf32>
    %250 = arith.mulf %238, %249 : vector<16x32xf32>
    %251 = vector.broadcast %240 : vector<1x32xf32> to vector<16x32xf32>
    %252 = arith.mulf %250, %251 : vector<16x32xf32>
    %253 = arith.truncf %252 : vector<16x32xf32> to vector<16x32xbf16>
    %c1_89 = arith.constant 1 : index
    %c0_90 = arith.constant 0 : index
    %c0_91 = arith.constant 0 : index
    %254 = vector.load %arg6[%c1_89, %c0_90, %c0_91] : memref<2x32x128xbf16, #tpu.memory_space<vmem>>, vector<1x32x128xbf16>
    %255 = vector.shape_cast %254 : vector<1x32x128xbf16> to vector<32x128xbf16>
    %cst_92 = arith.constant dense<0.000000e+00> : vector<16x128xf32>
    %256 = tpu.matmul %253, %255, %cst_92 {dimension_numbers = #tpu.dot_dimension_numbers<[1], [0], [0], [1], [0, 0, 1, 1], [], []>} : vector<16x32xbf16>, vector<32x128xbf16>, vector<16x128xf32> -> vector<16x128xf32>
    %257 = arith.negf %256 : vector<16x128xf32>
    %258 = math.exp %257 : vector<16x128xf32>
    %cst_93 = arith.constant 1.000000e+00 : f32
    %259 = vector.broadcast %cst_93 : f32 to vector<16x128xf32>
    %260 = arith.addf %259, %258 : vector<16x128xf32>
    %261 = arith.divf %259, %260 : vector<16x128xf32>
    %262 = arith.mulf %256, %261 : vector<16x128xf32>
    %263 = arith.truncf %262 : vector<16x128xf32> to vector<16x128xbf16>
    %c1_94 = arith.constant 1 : index
    %c0_95 = arith.constant 0 : index
    %c0_96 = arith.constant 0 : index
    %264 = vector.load %arg7[%c1_94, %c0_95, %c0_96] : memref<2x128x32xbf16, #tpu.memory_space<vmem>>, vector<1x128x32xbf16>
    %265 = vector.shape_cast %264 : vector<1x128x32xbf16> to vector<128x32xbf16>
    %cst_97 = arith.constant dense<0.000000e+00> : vector<16x32xf32>
    %266 = tpu.matmul %263, %265, %cst_97 {dimension_numbers = #tpu.dot_dimension_numbers<[1], [0], [0], [1], [0, 0, 1, 1], [], []>} : vector<16x128xbf16>, vector<128x32xbf16>, vector<16x32xf32> -> vector<16x32xf32>
    %267 = arith.addf %238, %266 : vector<16x32xf32>
    %c0_98 = arith.constant 0 : index
    %c0_99 = arith.constant 0 : index
    %268 = vector.load %arg8[%c0_98, %c0_99] : memref<1x32xf32, #tpu.memory_space<vmem>>, vector<1x32xf32>
    %269 = arith.mulf %267, %267 : vector<16x32xf32>
    %cst_100 = arith.constant dense<0.000000e+00> : vector<16xf32>
    %270 = vector.multi_reduction <add>, %269, %cst_100 [1] : vector<16x32xf32> to vector<16xf32>
    %271 = vector.shape_cast %270 : vector<16xf32> to vector<16x1xf32>
    %cst_101 = arith.constant 3.200000e+01 : f32
    %272 = vector.broadcast %cst_101 : f32 to vector<16x1xf32>
    %273 = arith.divf %271, %272 : vector<16x1xf32>
    %cst_102 = arith.constant 9.99999974E-6 : f32
    %274 = vector.broadcast %cst_102 : f32 to vector<16x1xf32>
    %275 = arith.addf %273, %274 : vector<16x1xf32>
    %276 = math.rsqrt %275 : vector<16x1xf32>
    %277 = vector.broadcast %276 : vector<16x1xf32> to vector<16x32xf32>
    %278 = arith.mulf %267, %277 : vector<16x32xf32>
    %279 = vector.broadcast %268 : vector<1x32xf32> to vector<16x32xf32>
    %280 = arith.mulf %278, %279 : vector<16x32xf32>
    %281 = arith.truncf %280 : vector<16x32xf32> to vector<16x32xbf16>
    %c0_103 = arith.constant 0 : index
    %c0_104 = arith.constant 0 : index
    %282 = vector.load %arg9[%c0_103, %c0_104] : memref<32x256xbf16, #tpu.memory_space<vmem>>, vector<32x256xbf16>
    %cst_105 = arith.constant dense<0.000000e+00> : vector<16x256xf32>
    %283 = tpu.matmul %281, %282, %cst_105 {dimension_numbers = #tpu.dot_dimension_numbers<[1], [0], [0], [1], [0, 0, 1, 1], [], []>} : vector<16x32xbf16>, vector<32x256xbf16>, vector<16x256xf32> -> vector<16x256xf32>
    %284 = vector.extract_strided_slice %283 {offsets = [0, 0], sizes = [8, 256], strides = [1, 1]} : vector<16x256xf32> to vector<8x256xf32>
    %c0_106 = arith.constant 0 : index
    %c0_107 = arith.constant 0 : index
    %c0_108 = arith.constant 0 : index
    %285 = vector.load %arg10[%c0_106, %c0_107, %c0_108] : memref<2x8x256xf32, #tpu.memory_space<vmem>>, vector<1x8x256xf32>
    %286 = vector.shape_cast %285 : vector<1x8x256xf32> to vector<8x256xf32>
    %287 = vector.shape_cast %284 : vector<8x256xf32> to vector<1x8x256xf32>
    tpu.vector_store %arg10[%c0_106, %c0_107, %c0_108], %287 {strides = array<i32>} : memref<2x8x256xf32, #tpu.memory_space<vmem>>, vector<1x8x256xf32>,
    %288 = vector.extract_strided_slice %283 {offsets = [8, 0], sizes = [8, 256], strides = [1, 1]} : vector<16x256xf32> to vector<8x256xf32>
    %c1_109 = arith.constant 1 : index
    %c0_110 = arith.constant 0 : index
    %c0_111 = arith.constant 0 : index
    %289 = vector.load %arg10[%c1_109, %c0_110, %c0_111] : memref<2x8x256xf32, #tpu.memory_space<vmem>>, vector<1x8x256xf32>
    %290 = vector.shape_cast %289 : vector<1x8x256xf32> to vector<8x256xf32>
    %291 = vector.shape_cast %288 : vector<8x256xf32> to vector<1x8x256xf32>
    tpu.vector_store %arg10[%c1_109, %c0_110, %c0_111], %291 {strides = array<i32>} : memref<2x8x256xf32, #tpu.memory_space<vmem>>, vector<1x8x256xf32>,
    return
  }
}

</mosaic_0001>

<llo_original>
// kernel: temporal_depth_decoder_forward.1
$region0: #{temporal_depth_decoder_forward.1}
  #allocation0 [shape = 'u32[]', space=smem, size = 0x4, offset = 0x4, fixed_abs, tag = 'smem constant byte address 0x4 - core index']
  #allocation1 [shape = 'u32[72,128]{1,0:T(1,128)}', space=vmem, size = 0x9000, scoped, tag = 'internal scratch']
  %s0 = inlined_call_operand.vmem [shape: f32[2,8,32], index: 0, kind: input, shape index: {}]
  %s1 = inlined_call_operand.vmem [shape: f32[16,32], index: 1, kind: input, shape index: {}]
  %s2 = inlined_call_operand.hbm [shape: f32[2,1,32], index: 2, kind: input, shape index: {}]
  %s3 = inlined_call_operand.vmem [shape: bf16[2,32,96], index: 3, kind: input, shape index: {}]
  %s4 = inlined_call_operand.vmem [shape: bf16[2,32,32], index: 4, kind: input, shape index: {}]
  %s5 = inlined_call_operand.hbm [shape: f32[2,1,32], index: 5, kind: input, shape index: {}]
  %s6 = inlined_call_operand.vmem [shape: bf16[2,32,128], index: 6, kind: input, shape index: {}]
  %s7 = inlined_call_operand.vmem [shape: bf16[2,128,32], index: 7, kind: input, shape index: {}]
  %s8 = inlined_call_operand.vmem [shape: f32[1,32], index: 8, kind: input, shape index: {}]
  %s9 = inlined_call_operand.vmem [shape: bf16[32,256], index: 9, kind: input, shape index: {}]
  %s10 = inlined_call_operand.vmem [shape: f32[2,8,256], index: 10, kind: output, shape index: {}]
  %s11 = sld [smem:[#allocation0]]
  $region58: #{temporal_depth_decoder_forward.1} parent=0
    _
  %s13 = ssub.s32 1, %s11
  %s14 = scalar_select 0, %s13, %s11
  $region1: #{temporal_depth_decoder_forward.1} parent=0
    #allocation2 [shape = 'u8[1024]{0}', space=vmem, size = 0x400, scoped, tag = 'input window, operand 2, single buffered']
    #allocation3 [shape = 's32[1]{0}', space=sflag, size = 0x4, scoped, tag = 'scoped memory for temporal_depth_decoder_forward.1']
    #allocation4 [shape = 'u8[1024]{0}', space=vmem, size = 0x400, scoped, tag = 'input window, operand 5, single buffered']
    #allocation5 [shape = 's32[1]{0}', space=sflag, size = 0x4, scoped, tag = 'scoped memory for temporal_depth_decoder_forward.1']
    %15 = vsyncpa [#allocation3], 0
    %16 = vsyncpa [#allocation5], 0
    // Predicated region
    $region2: #{temporal_depth_decoder_forward.1} parent=1 // pred_check
      _
    $region3: #{temporal_depth_decoder_forward.1} parent=1 // pred_check_branch
      %18 = sbr.rel (0) target = $region5
    $region4: #{temporal_depth_decoder_forward.1} parent=1 // pred_region
      _
    $region5: #{temporal_depth_decoder_forward.1} parent=1 // pred_fallthru
      _
    // Predicated region
    $region6: #{temporal_depth_decoder_forward.1} parent=1 // pred_check
      _
    $region7: #{temporal_depth_decoder_forward.1} parent=1 // pred_check_branch
      %20 = sbr.rel (0) target = $region9
    $region8: #{temporal_depth_decoder_forward.1} parent=1 // pred_region
      _
    $region9: #{temporal_depth_decoder_forward.1} parent=1 // pred_fallthru
      _
    // Predicated region
    $region10: #{temporal_depth_decoder_forward.1} parent=1 // pred_check
      _
    $region11: #{temporal_depth_decoder_forward.1} parent=1 // pred_check_branch
      %22 = sbr.rel (0) target = $region13
    $region12: #{temporal_depth_decoder_forward.1} parent=1 // pred_region
      %24 = vsyncadd [#allocation3], 0
      %s25 = sshll.u32 %s2, 4
      %s26 = int_to_ptr.hbm [resolvable:$true] %s25
      %s27 = sshll.u32 [#allocation2], 4
      %s28 = int_to_ptr.vmem [resolvable:$true] %s27
      %33 = dma.hbm_to_vmem [thread:$0]  %s26, 32, %s28, [#allocation3], 16, 16, 1
    $region13: #{temporal_depth_decoder_forward.1} parent=1 // pred_fallthru
      _
    // Predicated region
    $region14: #{temporal_depth_decoder_forward.1} parent=1 // pred_check
      _
    $region15: #{temporal_depth_decoder_forward.1} parent=1 // pred_check_branch
      %35 = sbr.rel (0) target = $region17
    $region16: #{temporal_depth_decoder_forward.1} parent=1 // pred_region
      _
    $region17: #{temporal_depth_decoder_forward.1} parent=1 // pred_fallthru
      _
    // Predicated region
    $region18: #{temporal_depth_decoder_forward.1} parent=1 // pred_check
      _
    $region19: #{temporal_depth_decoder_forward.1} parent=1 // pred_check_branch
      %37 = sbr.rel (0) target = $region21
    $region20: #{temporal_depth_decoder_forward.1} parent=1 // pred_region
      _
    $region21: #{temporal_depth_decoder_forward.1} parent=1 // pred_fallthru
      _
    // Predicated region
    $region22: #{temporal_depth_decoder_forward.1} parent=1 // pred_check
      _
    $region23: #{temporal_depth_decoder_forward.1} parent=1 // pred_check_branch
      %39 = sbr.rel (0) target = $region25
    $region24: #{temporal_depth_decoder_forward.1} parent=1 // pred_region
      %41 = vsyncadd [#allocation5], 0
      %s42 = sshll.u32 %s5, 4
      %s43 = int_to_ptr.hbm [resolvable:$true] %s42
      %s44 = sshll.u32 [#allocation4], 4
      %s45 = int_to_ptr.vmem [resolvable:$true] %s44
      %50 = dma.hbm_to_vmem [thread:$0]  %s43, 32, %s45, [#allocation5], 16, 16, 1
    $region25: #{temporal_depth_decoder_forward.1} parent=1 // pred_fallthru
      _
    // Predicated region
    $region26: #{temporal_depth_decoder_forward.1} parent=1 // pred_check
      _
    $region27: #{temporal_depth_decoder_forward.1} parent=1 // pred_check_branch
      %52 = sbr.rel (0) target = $region29
    $region28: #{temporal_depth_decoder_forward.1} parent=1 // pred_region
      _
    $region29: #{temporal_depth_decoder_forward.1} parent=1 // pred_fallthru
      _
    // Predicated region
    $region30: #{temporal_depth_decoder_forward.1} parent=1 // pred_check
      _
    $region31: #{temporal_depth_decoder_forward.1} parent=1 // pred_check_branch
      %54 = sbr.rel (0) target = $region33
    $region32: #{temporal_depth_decoder_forward.1} parent=1 // pred_region
      _
    $region33: #{temporal_depth_decoder_forward.1} parent=1 // pred_fallthru
      _
    // Predicated region
    $region34: #{temporal_depth_decoder_forward.1} parent=1 // pred_check
      _
    $region35: #{temporal_depth_decoder_forward.1} parent=1 // pred_check_branch
      %56 = sbr.rel (0) target = $region37
    $region36: #{temporal_depth_decoder_forward.1} parent=1 // pred_region
      _
    $region37: #{temporal_depth_decoder_forward.1} parent=1 // pred_fallthru
      _
    // Predicated region
    $region38: #{temporal_depth_decoder_forward.1} parent=1 // pred_check
      _
    $region39: #{temporal_depth_decoder_forward.1} parent=1 // pred_check_branch
      %58 = sbr.rel (0) target = $region41
    $region40: #{temporal_depth_decoder_forward.1} parent=1 // pred_region
      _
    $region41: #{temporal_depth_decoder_forward.1} parent=1 // pred_fallthru
      _
    // Predicated region
    $region42: #{temporal_depth_decoder_forward.1} parent=1 // pred_check
      _
    $region43: #{temporal_depth_decoder_forward.1} parent=1 // pred_check_branch
      %60 = sbr.rel (0) target = $region45
    $region44: #{temporal_depth_decoder_forward.1} parent=1 // pred_region
      %62 = dma.done [#allocation3], 32
    $region45: #{temporal_depth_decoder_forward.1} parent=1 // pred_fallthru
      _
    // Predicated region
    $region46: #{temporal_depth_decoder_forward.1} parent=1 // pred_check
      _
    $region47: #{temporal_depth_decoder_forward.1} parent=1 // pred_check_branch
      %64 = sbr.rel (0) target = $region49
    $region48: #{temporal_depth_decoder_forward.1} parent=1 // pred_region
      %66 = dma.done [#allocation5], 32
    $region49: #{temporal_depth_decoder_forward.1} parent=1 // pred_fallthru
      _
    %v68 = vlaneseq
    %v69 = vshrl.u32 %v68, 7
    %v70 = vlaneseq
    %v71 = vand.u32 %v70, 127
    %vm72 = vcmp.le.s32.totalorder %v71, %v69
    %v73 = vsel %vm72, 0.0, -1e+09
    %vm74 = vcmask 64512
    %v75 = vsel %vm74, %v73, -1e+09
    %77 = vrot.lane.b32.xlu0 %v73, 8
    %v78 = vpop.permute.xlu0 %77
    %v80 = vsel %vm74, -1e+09, %v78
    %v81 = vld [vmem:[%s1] sm:$0xff]
    %v82 = vld [vmem:[%s0] sm:$0xff]
    %v83 = vadd.f32 %v82, %v81
    %s84 = scalar_lea.vmem %s0, 8
    %v85 = vld [vmem:[%s84] sm:$0xff]
    %v86 = vadd.f32 %v85, %v81
    %v87 = vld [vmem:[#allocation2] sm:$0x1]
    %v88 = vmul.f32 %v83, %v83
    %v89 = vmul.f32 %v86, %v86
    %vm90 = vcmask 261120
    %v91 = vsel %vm90, %v88, 0.0
    %92 = vadd.xlane.f32.xlu0 %v91
    %v93 = vpop.xlane.xlu0 %92
    %v94 = vsel %vm90, %v89, 0.0
    %95 = vadd.xlane.f32.xlu0 %v94
    %v96 = vpop.xlane.xlu0 %95
    %v97 = vrcp.pop 32.0
    %v98 = vmul.f32 32.0, %v97
    %v99 = vsub.f32 1.0, %v98
    %v100 = vmul.f32 %v97, %v99
    %v101 = vadd.f32 %v97, %v100
    %vm102 = vweird.f32 %v97
    %v103 = vsel %vm102, %v97, %v101
    %v104 = vmul.f32 %v93, %v103
    %v105 = vmul.f32 %v96, %v103
    %v106 = vadd.f32 %v104, 1e-05
    %v107 = vadd.f32 %v105, 1e-05
    %v108 = vrsqrt.pop %v106
    %v109 = vmul.f32 %v108, %v106
    %v110 = vmul.f32 %v109, %v108
    %v111 = vmul.f32 0.5, %v110
    %v112 = vsub.f32 1.5, %v111
    %v113 = vmul.f32 %v108, %v112
    %vm114 = vweird.f32 %v106
    %vm115 = vweird.f32 %v108
    %vm116 = vmor %vm114, %vm115
    %v117 = vsel %vm116, %v108, %v113
    %v118 = vrsqrt.pop %v107
    %v119 = vmul.f32 %v118, %v107
    %v120 = vmul.f32 %v119, %v118
    %v121 = vmul.f32 0.5, %v120
    %v122 = vsub.f32 1.5, %v121
    %v123 = vmul.f32 %v118, %v122
    %vm124 = vweird.f32 %v107
    %vm125 = vweird.f32 %v118
    %vm126 = vmor %vm124, %vm125
    %v127 = vsel %vm126, %v118, %v123
    %v128 = vmul.f32 %v83, %v117
    %v129 = vmul.f32 %v86, %v127
    %v131 = vperm.slane %v87, 0
    %v133 = vmul.f32 %v128, %v131
    %v134 = vmul.f32 %v129, %v131
    %v135 = vpack.c.bf16 %v134, %v133
    %v136 = vld [vmem:[%s3] sm:$0xf]
    %v137 = vld [vmem:[%s3 + $0x4] sm:$0xf]
    %v138 = vld [vmem:[%s3 + $0x8] sm:$0xf]
    %v139 = vld [vmem:[%s3 + $0xc] sm:$0xf]
    %v144 = vunpack.c.l.b16 %v136
    %v145 = vunpack.c.l.b16 %v137
    %v146 = vunpack.c.l.b16 %v138
    %v147 = vunpack.c.l.b16 %v139
    %v148 = vpack.c.b16 %v145, %v144
    %v149 = vpack.c.b16 %v147, %v146
    %v153 = vsel %vm90, %v135, 0
    %155 = vmatpush.bf16.msra.mxu0 0
    %156 = vmatpush.bf16.msra.mxu0 0
    %157 = vmatpush.bf16.msra.mxu0 0
    %158 = vmatpush.bf16.msra.mxu0 0
    %159 = vmatpush.bf16.msra.mxu0 0
    %160 = vmatpush.bf16.msra.mxu0 0
    %161 = vmatpush.bf16.msra.mxu0 %v149
    %162 = vmatpush.bf16.msra.mxu0 %v148
    %163 = vmatmul.bf16.gmra.mxu0 %v153
    %v164 = vpop.f32.mrf.mxu0
    %v165 = vadd.f32 0.0, %v164
    %v166 = vpop.f32.mrf.mxu0
    %v167 = vadd.f32 0.0, %v166
    %168 = vdwg.mxu0
    %v169 = vmul.f32 %v165, 0.35355338
    %v170 = vmul.f32 %v167, 0.35355338
    %v171 = vpack.c.bf16 %v170, %v169
    %v172 = vpack.c.bf16 %v167, %v165
    %174 = vrot.lane.b32.xlu0 %v172, 96
    %v175 = vpop.permute.xlu0 %174
    %v177 = vsel %vm74, %v171, 0
    %v180 = vsel %vm74, %v175, 0
    %182 = vmatpush.bf16.xpose.msra.mxu0 0
    %183 = vmatpush.bf16.xpose.msra.mxu0 0
    %184 = vmatpush.bf16.xpose.msra.mxu0 0
    %185 = vmatpush.bf16.xpose.msra.mxu0 0
    %186 = vmatpush.bf16.xpose.msra.mxu0 0
    %187 = vmatpush.bf16.xpose.msra.mxu0 0
    %188 = vmatpush.bf16.xpose.msra.mxu0 0
    %189 = vmatpush.bf16.xpose.msra.mxu0 %v180
    %190 = vmatmul.bf16.gmra.mxu0 %v177
    %v191 = vpop.f32.mrf.mxu0
    %v192 = vadd.f32 %v75, %v191
    %v193 = vpop.f32.mrf.mxu0
    %v194 = vadd.f32 %v80, %v193
    %195 = vdwg.mxu0
    %v196 = vmul.f32 %v192, 1.442695
    %v197 = vpow.pop %v196
    %v198 = vmul.f32 %v194, 1.442695
    %v199 = vpow.pop %v198
    %vm200 = vcmask 130048
    %v201 = vsel %vm200, %v197, 0.0
    %202 = vadd.xlane.f32.xlu0 %v201
    %v203 = vpop.xlane.xlu0 %202
    %v204 = vsel %vm200, %v199, 0.0
    %205 = vadd.xlane.f32.xlu0 %v204
    %v206 = vpop.xlane.xlu0 %205
    %v207 = vrcp.pop %v203
    %v208 = vrcp.pop %v206
    %v209 = vmul.f32 %v197, %v207
    %v210 = vmul.f32 %v199, %v208
    %v211 = vpack.c.bf16 %v210, %v209
    %212 = vrot.lane.b32.xlu0 %v172, 64
    %v213 = vpop.permute.xlu0 %212
    %v216 = vsel %vm200, %v211, 0
    %218 = vmatpush.bf16.msra.mxu0 0
    %219 = vmatpush.bf16.msra.mxu0 0
    %220 = vmatpush.bf16.msra.mxu0 0
    %221 = vmatpush.bf16.msra.mxu0 0
    %222 = vmatpush.bf16.msra.mxu0 0
    %223 = vmatpush.bf16.msra.mxu0 0
    %224 = vmatpush.bf16.msra.mxu0 0
    %225 = vmatpush.bf16.msra.mxu0 %v213
    %226 = vmatmul.bf16.gmra.mxu0 %v216
    %v227 = vpop.f32.mrf.mxu0
    %v228 = vadd.f32 0.0, %v227
    %v229 = vpop.f32.mrf.mxu0
    %v230 = vadd.f32 0.0, %v229
    %231 = vdwg.mxu0
    %233 = vrot.lane.b32.xlu0 %v171, 120
    %v234 = vpop.permute.xlu0 %233
    %235 = vrot.lane.b32.xlu0 %v172, 88
    %v236 = vpop.permute.xlu0 %235
    %v238 = vsel %vm74, %v234, 0
    %v241 = vsel %vm74, %v236, 0
    %243 = vmatpush.bf16.xpose.msra.mxu0 0
    %244 = vmatpush.bf16.xpose.msra.mxu0 0
    %245 = vmatpush.bf16.xpose.msra.mxu0 0
    %246 = vmatpush.bf16.xpose.msra.mxu0 0
    %247 = vmatpush.bf16.xpose.msra.mxu0 0
    %248 = vmatpush.bf16.xpose.msra.mxu0 0
    %249 = vmatpush.bf16.xpose.msra.mxu0 0
    %250 = vmatpush.bf16.xpose.msra.mxu0 %v241
    %251 = vmatmul.bf16.gmra.mxu0 %v238
    %v252 = vpop.f32.mrf.mxu0
    %v253 = vadd.f32 %v75, %v252
    %v254 = vpop.f32.mrf.mxu0
    %v255 = vadd.f32 %v80, %v254
    %256 = vdwg.mxu0
    %v257 = vmul.f32 %v253, 1.442695
    %v258 = vpow.pop %v257
    %v259 = vmul.f32 %v255, 1.442695
    %v260 = vpow.pop %v259
    %v261 = vsel %vm200, %v258, 0.0
    %262 = vadd.xlane.f32.xlu0 %v261
    %v263 = vpop.xlane.xlu0 %262
    %v264 = vsel %vm200, %v260, 0.0
    %265 = vadd.xlane.f32.xlu0 %v264
    %v266 = vpop.xlane.xlu0 %265
    %v267 = vrcp.pop %v263
    %v268 = vrcp.pop %v266
    %v269 = vmul.f32 %v258, %v267
    %v270 = vmul.f32 %v260, %v268
    %v271 = vpack.c.bf16 %v270, %v269
    %272 = vrot.lane.b32.xlu0 %v172, 56
    %v273 = vpop.permute.xlu0 %272
    %v276 = vsel %vm200, %v271, 0
    %278 = vmatpush.bf16.msra.mxu0 0
    %279 = vmatpush.bf16.msra.mxu0 0
    %280 = vmatpush.bf16.msra.mxu0 0
    %281 = vmatpush.bf16.msra.mxu0 0
    %282 = vmatpush.bf16.msra.mxu0 0
    %283 = vmatpush.bf16.msra.mxu0 0
    %284 = vmatpush.bf16.msra.mxu0 0
    %285 = vmatpush.bf16.msra.mxu0 %v273
    %286 = vmatmul.bf16.gmra.mxu0 %v276
    %v287 = vpop.f32.mrf.mxu0
    %v288 = vadd.f32 0.0, %v287
    %v289 = vpop.f32.mrf.mxu0
    %v290 = vadd.f32 0.0, %v289
    %291 = vdwg.mxu0
    %292 = vrot.lane.b32.xlu0 %v171, 112
    %v293 = vpop.permute.xlu0 %292
    %294 = vrot.lane.b32.xlu0 %v172, 80
    %v295 = vpop.permute.xlu0 %294
    %v297 = vsel %vm74, %v293, 0
    %v300 = vsel %vm74, %v295, 0
    %302 = vmatpush.bf16.xpose.msra.mxu0 0
    %303 = vmatpush.bf16.xpose.msra.mxu0 0
    %304 = vmatpush.bf16.xpose.msra.mxu0 0
    %305 = vmatpush.bf16.xpose.msra.mxu0 0
    %306 = vmatpush.bf16.xpose.msra.mxu0 0
    %307 = vmatpush.bf16.xpose.msra.mxu0 0
    %308 = vmatpush.bf16.xpose.msra.mxu0 0
    %309 = vmatpush.bf16.xpose.msra.mxu0 %v300
    %310 = vmatmul.bf16.gmra.mxu0 %v297
    %v311 = vpop.f32.mrf.mxu0
    %v312 = vadd.f32 %v75, %v311
    %v313 = vpop.f32.mrf.mxu0
    %v314 = vadd.f32 %v80, %v313
    %315 = vdwg.mxu0
    %v316 = vmul.f32 %v312, 1.442695
    %v317 = vpow.pop %v316
    %v318 = vmul.f32 %v314, 1.442695
    %v319 = vpow.pop %v318
    %v320 = vsel %vm200, %v317, 0.0
    %321 = vadd.xlane.f32.xlu0 %v320
    %v322 = vpop.xlane.xlu0 %321
    %v323 = vsel %vm200, %v319, 0.0
    %324 = vadd.xlane.f32.xlu0 %v323
    %v325 = vpop.xlane.xlu0 %324
    %v326 = vrcp.pop %v322
    %v327 = vrcp.pop %v325
    %v328 = vmul.f32 %v317, %v326
    %v329 = vmul.f32 %v319, %v327
    %v330 = vpack.c.bf16 %v329, %v328
    %331 = vrot.lane.b32.xlu0 %v172, 48
    %v332 = vpop.permute.xlu0 %331
    %v335 = vsel %vm200, %v330, 0
    %337 = vmatpush.bf16.msra.mxu0 0
    %338 = vmatpush.bf16.msra.mxu0 0
    %339 = vmatpush.bf16.msra.mxu0 0
    %340 = vmatpush.bf16.msra.mxu0 0
    %341 = vmatpush.bf16.msra.mxu0 0
    %342 = vmatpush.bf16.msra.mxu0 0
    %343 = vmatpush.bf16.msra.mxu0 0
    %344 = vmatpush.bf16.msra.mxu0 %v332
    %345 = vmatmul.bf16.gmra.mxu0 %v335
    %v346 = vpop.f32.mrf.mxu0
    %v347 = vadd.f32 0.0, %v346
    %v348 = vpop.f32.mrf.mxu0
    %v349 = vadd.f32 0.0, %v348
    %350 = vdwg.mxu0
    %351 = vrot.lane.b32.xlu0 %v171, 104
    %v352 = vpop.permute.xlu0 %351
    %353 = vrot.lane.b32.xlu0 %v172, 72
    %v354 = vpop.permute.xlu0 %353
    %v356 = vsel %vm74, %v352, 0
    %v359 = vsel %vm74, %v354, 0
    %361 = vmatpush.bf16.xpose.msra.mxu0 0
    %362 = vmatpush.bf16.xpose.msra.mxu0 0
    %363 = vmatpush.bf16.xpose.msra.mxu0 0
    %364 = vmatpush.bf16.xpose.msra.mxu0 0
    %365 = vmatpush.bf16.xpose.msra.mxu0 0
    %366 = vmatpush.bf16.xpose.msra.mxu0 0
    %367 = vmatpush.bf16.xpose.msra.mxu0 0
    %368 = vmatpush.bf16.xpose.msra.mxu0 %v359
    %369 = vmatmul.bf16.gmra.mxu0 %v356
    %v370 = vpop.f32.mrf.mxu0
    %v371 = vadd.f32 %v75, %v370
    %v372 = vpop.f32.mrf.mxu0
    %v373 = vadd.f32 %v80, %v372
    %374 = vdwg.mxu0
    %v375 = vmul.f32 %v371, 1.442695
    %v376 = vpow.pop %v375
    %v377 = vmul.f32 %v373, 1.442695
    %v378 = vpow.pop %v377
    %v379 = vsel %vm200, %v376, 0.0
    %380 = vadd.xlane.f32.xlu0 %v379
    %v381 = vpop.xlane.xlu0 %380
    %v382 = vsel %vm200, %v378, 0.0
    %383 = vadd.xlane.f32.xlu0 %v382
    %v384 = vpop.xlane.xlu0 %383
    %v385 = vrcp.pop %v381
    %v386 = vrcp.pop %v384
    %v387 = vmul.f32 %v376, %v385
    %v388 = vmul.f32 %v378, %v386
    %v389 = vpack.c.bf16 %v388, %v387
    %390 = vrot.lane.b32.xlu0 %v172, 40
    %v391 = vpop.permute.xlu0 %390
    %v394 = vsel %vm200, %v389, 0
    %396 = vmatpush.bf16.msra.mxu0 0
    %397 = vmatpush.bf16.msra.mxu0 0
    %398 = vmatpush.bf16.msra.mxu0 0
    %399 = vmatpush.bf16.msra.mxu0 0
    %400 = vmatpush.bf16.msra.mxu0 0
    %401 = vmatpush.bf16.msra.mxu0 0
    %402 = vmatpush.bf16.msra.mxu0 0
    %403 = vmatpush.bf16.msra.mxu0 %v391
    %404 = vmatmul.bf16.gmra.mxu0 %v394
    %v405 = vpop.f32.mrf.mxu0
    %v406 = vadd.f32 0.0, %v405
    %v407 = vpop.f32.mrf.mxu0
    %v408 = vadd.f32 0.0, %v407
    %409 = vdwg.mxu0
    %412 = vrot.lane.b32.xlu0 %v288, 8
    %v413 = vpop.permute.xlu0 %412
    %414 = vrot.lane.b32.xlu0 %v290, 8
    %v415 = vpop.permute.xlu0 %414
    %420 = vrot.lane.b32.xlu0 %v347, 16
    %v421 = vpop.permute.xlu0 %420
    %422 = vrot.lane.b32.xlu0 %v349, 16
    %v423 = vpop.permute.xlu0 %422
    %428 = vrot.lane.b32.xlu0 %v406, 24
    %v429 = vpop.permute.xlu0 %428
    %430 = vrot.lane.b32.xlu0 %v408, 24
    %v431 = vpop.permute.xlu0 %430
    %v434 = vsel %vm74, %v228, %v413
    %v435 = vsel %vm74, %v230, %v415
    %v436 = vsel %vm200, %v434, %v421
    %v437 = vsel %vm200, %v435, %v423
    %vm438 = vcmask 195584
    %v439 = vsel %vm438, %v436, %v429
    %v440 = vsel %vm438, %v437, %v431
    %v441 = vpack.c.bf16 %v440, %v439
    %v442 = vld [vmem:[%s4] sm:$0xf]
    %v443 = vld [vmem:[%s4 + $0x4] sm:$0xf]
    %v444 = vld [vmem:[%s4 + $0x8] sm:$0xf]
    %v445 = vld [vmem:[%s4 + $0xc] sm:$0xf]
    %v450 = vunpack.c.l.b16 %v442
    %v451 = vunpack.c.l.b16 %v443
    %v452 = vunpack.c.l.b16 %v444
    %v453 = vunpack.c.l.b16 %v445
    %v454 = vpack.c.b16 %v451, %v450
    %v455 = vpack.c.b16 %v453, %v452
    %v459 = vsel %vm90, %v441, 0
    %461 = vmatpush.bf16.msra.mxu0 0
    %462 = vmatpush.bf16.msra.mxu0 0
    %463 = vmatpush.bf16.msra.mxu0 0
    %464 = vmatpush.bf16.msra.mxu0 0
    %465 = vmatpush.bf16.msra.mxu0 0
    %466 = vmatpush.bf16.msra.mxu0 0
    %467 = vmatpush.bf16.msra.mxu0 %v455
    %468 = vmatpush.bf16.msra.mxu0 %v454
    %469 = vmatmul.bf16.gmra.mxu0 %v459
    %v470 = vpop.f32.mrf.mxu0
    %v471 = vadd.f32 0.0, %v470
    %v472 = vpop.f32.mrf.mxu0
    %v473 = vadd.f32 0.0, %v472
    %474 = vdwg.mxu0
    %v475 = vadd.f32 %v83, %v471
    %v476 = vadd.f32 %v86, %v473
    %v477 = vld [vmem:[#allocation4] sm:$0x1]
    %v478 = vmul.f32 %v475, %v475
    %v479 = vmul.f32 %v476, %v476
    %v480 = vsel %vm90, %v478, 0.0
    %481 = vadd.xlane.f32.xlu0 %v480
    %v482 = vpop.xlane.xlu0 %481
    %v483 = vsel %vm90, %v479, 0.0
    %484 = vadd.xlane.f32.xlu0 %v483
    %v485 = vpop.xlane.xlu0 %484
    %v486 = vmul.f32 %v482, %v103
    %v487 = vmul.f32 %v485, %v103
    %v488 = vadd.f32 %v486, 1e-05
    %v489 = vadd.f32 %v487, 1e-05
    %v490 = vrsqrt.pop %v488
    %v491 = vmul.f32 %v490, %v488
    %v492 = vmul.f32 %v491, %v490
    %v493 = vmul.f32 0.5, %v492
    %v494 = vsub.f32 1.5, %v493
    %v495 = vmul.f32 %v490, %v494
    %vm496 = vweird.f32 %v488
    %vm497 = vweird.f32 %v490
    %vm498 = vmor %vm496, %vm497
    %v499 = vsel %vm498, %v490, %v495
    %v500 = vrsqrt.pop %v489
    %v501 = vmul.f32 %v500, %v489
    %v502 = vmul.f32 %v501, %v500
    %v503 = vmul.f32 0.5, %v502
    %v504 = vsub.f32 1.5, %v503
    %v505 = vmul.f32 %v500, %v504
    %vm506 = vweird.f32 %v489
    %vm507 = vweird.f32 %v500
    %vm508 = vmor %vm506, %vm507
    %v509 = vsel %vm508, %v500, %v505
    %v510 = vmul.f32 %v475, %v499
    %v511 = vmul.f32 %v476, %v509
    %v513 = vperm.slane %v477, 0
    %v515 = vmul.f32 %v510, %v513
    %v516 = vmul.f32 %v511, %v513
    %v517 = vpack.c.bf16 %v516, %v515
    %v518 = vld [vmem:[%s6] sm:$0xf]
    %v519 = vld [vmem:[%s6 + $0x4] sm:$0xf]
    %v520 = vld [vmem:[%s6 + $0x8] sm:$0xf]
    %v521 = vld [vmem:[%s6 + $0xc] sm:$0xf]
    %v526 = vunpack.c.l.b16 %v518
    %v527 = vunpack.c.l.b16 %v519
    %v528 = vunpack.c.l.b16 %v520
    %v529 = vunpack.c.l.b16 %v521
    %v530 = vpack.c.b16 %v527, %v526
    %v531 = vpack.c.b16 %v529, %v528
    %v535 = vsel %vm90, %v517, 0
    %537 = vmatpush.bf16.msra.mxu0 0
    %538 = vmatpush.bf16.msra.mxu0 0
    %539 = vmatpush.bf16.msra.mxu0 0
    %540 = vmatpush.bf16.msra.mxu0 0
    %541 = vmatpush.bf16.msra.mxu0 0
    %542 = vmatpush.bf16.msra.mxu0 0
    %543 = vmatpush.bf16.msra.mxu0 %v531
    %544 = vmatpush.bf16.msra.mxu0 %v530
    %545 = vmatmul.bf16.gmra.mxu0 %v535
    %v546 = vpop.f32.mrf.mxu0
    %v547 = vadd.f32 0.0, %v546
    %v548 = vpop.f32.mrf.mxu0
    %v549 = vadd.f32 0.0, %v548
    %550 = vdwg.mxu0
    %v551 = vxor.u32 %v547, 2147483648
    %v552 = vxor.u32 %v549, 2147483648
    %v553 = vmul.f32 %v551, 1.442695
    %v554 = vpow.pop %v553
    %v555 = vmul.f32 %v552, 1.442695
    %v556 = vpow.pop %v555
    %v557 = vadd.f32 %v554, 1.0
    %v558 = vadd.f32 %v556, 1.0
    %v559 = vrcp.pop %v557
    %v560 = vmul.f32 %v557, %v559
    %v561 = vsub.f32 1.0, %v560
    %v562 = vmul.f32 %v559, %v561
    %v563 = vadd.f32 %v559, %v562
    %vm564 = vweird.f32 %v557
    %vm565 = vweird.f32 %v559
    %vm566 = vmor %vm564, %vm565
    %v567 = vsel %vm566, %v559, %v563
    %v568 = vand.u32 2147483647, %v557
    %vm569 = vcmp.eq.f32.partialorder %v568, 8.507059e+37
    %v570 = vand.u32 %v557, 2147483648
    %v571 = vor.u32 1.1754944e-38, %v570
    %v572 = vsel %vm569, %v571, %v567
    %v573 = vmul.f32 1.0, %v572
    %v574 = vrcp.pop %v558
    %v575 = vmul.f32 %v558, %v574
    %v576 = vsub.f32 1.0, %v575
    %v577 = vmul.f32 %v574, %v576
    %v578 = vadd.f32 %v574, %v577
    %vm579 = vweird.f32 %v558
    %vm580 = vweird.f32 %v574
    %vm581 = vmor %vm579, %vm580
    %v582 = vsel %vm581, %v574, %v578
    %v583 = vand.u32 2147483647, %v558
    %vm584 = vcmp.eq.f32.partialorder %v583, 8.507059e+37
    %v585 = vand.u32 %v558, 2147483648
    %v586 = vor.u32 1.1754944e-38, %v585
    %v587 = vsel %vm584, %v586, %v582
    %v588 = vmul.f32 1.0, %v587
    %v589 = vmul.f32 %v547, %v573
    %v590 = vmul.f32 %v549, %v588
    %v591 = vpack.c.bf16 %v590, %v589
    %v592 = vld [vmem:[%s7] sm:$0xf]
    %v593 = vld [vmem:[%s7 + $0x4] sm:$0xf]
    %v594 = vld [vmem:[%s7 + $0x8] sm:$0xf]
    %v595 = vld [vmem:[%s7 + $0xc] sm:$0xf]
    %v596 = vld [vmem:[%s7 + $0x10] sm:$0xf]
    %v597 = vld [vmem:[%s7 + $0x14] sm:$0xf]
    %v598 = vld [vmem:[%s7 + $0x18] sm:$0xf]
    %v599 = vld [vmem:[%s7 + $0x1c] sm:$0xf]
    %v600 = vld [vmem:[%s7 + $0x20] sm:$0xf]
    %v601 = vld [vmem:[%s7 + $0x24] sm:$0xf]
    %v602 = vld [vmem:[%s7 + $0x28] sm:$0xf]
    %v603 = vld [vmem:[%s7 + $0x2c] sm:$0xf]
    %v604 = vld [vmem:[%s7 + $0x30] sm:$0xf]
    %v605 = vld [vmem:[%s7 + $0x34] sm:$0xf]
    %v606 = vld [vmem:[%s7 + $0x38] sm:$0xf]
    %v607 = vld [vmem:[%s7 + $0x3c] sm:$0xf]
    %v624 = vunpack.c.l.b16 %v592
    %v625 = vunpack.c.l.b16 %v593
    %v626 = vunpack.c.l.b16 %v594
    %v627 = vunpack.c.l.b16 %v595
    %v628 = vunpack.c.l.b16 %v596
    %v629 = vunpack.c.l.b16 %v597
    %v630 = vunpack.c.l.b16 %v598
    %v631 = vunpack.c.l.b16 %v599
    %v632 = vunpack.c.l.b16 %v600
    %v633 = vunpack.c.l.b16 %v601
    %v634 = vunpack.c.l.b16 %v602
    %v635 = vunpack.c.l.b16 %v603
    %v636 = vunpack.c.l.b16 %v604
    %v637 = vunpack.c.l.b16 %v605
    %v638 = vunpack.c.l.b16 %v606
    %v639 = vunpack.c.l.b16 %v607
    %v640 = vpack.c.b16 %v625, %v624
    %v641 = vpack.c.b16 %v627, %v626
    %v642 = vpack.c.b16 %v629, %v628
    %v643 = vpack.c.b16 %v631, %v630
    %v644 = vpack.c.b16 %v633, %v632
    %v645 = vpack.c.b16 %v635, %v634
    %v646 = vpack.c.b16 %v637, %v636
    %v647 = vpack.c.b16 %v639, %v638
    %656 = vmatpush.bf16.msra.mxu0 %v647
    %657 = vmatpush.bf16.msra.mxu0 %v646
    %658 = vmatpush.bf16.msra.mxu0 %v645
    %659 = vmatpush.bf16.msra.mxu0 %v644
    %660 = vmatpush.bf16.msra.mxu0 %v643
    %661 = vmatpush.bf16.msra.mxu0 %v642
    %662 = vmatpush.bf16.msra.mxu0 %v641
    %663 = vmatpush.bf16.msra.mxu0 %v640
    %664 = vmatmul.bf16.gmra.mxu0 %v591
    %v665 = vpop.f32.mrf.mxu0
    %v666 = vadd.f32 0.0, %v665
    %v667 = vpop.f32.mrf.mxu0
    %v668 = vadd.f32 0.0, %v667
    %669 = vdwg.mxu0
    %v670 = vadd.f32 %v475, %v666
    %v671 = vadd.f32 %v476, %v668
    %s672 = scalar_lea.vmem [#allocation2], 1
    %v673 = vld [vmem:[%s672] sm:$0x1]
    %v674 = vmul.f32 %v670, %v670
    %v675 = vmul.f32 %v671, %v671
    %v676 = vsel %vm90, %v674, 0.0
    %677 = vadd.xlane.f32.xlu0 %v676
    %v678 = vpop.xlane.xlu0 %677
    %v679 = vsel %vm90, %v675, 0.0
    %680 = vadd.xlane.f32.xlu0 %v679
    %v681 = vpop.xlane.xlu0 %680
    %v682 = vmul.f32 %v678, %v103
    %v683 = vmul.f32 %v681, %v103
    %v684 = vadd.f32 %v682, 1e-05
    %v685 = vadd.f32 %v683, 1e-05
    %v686 = vrsqrt.pop %v684
    %v687 = vmul.f32 %v686, %v684
    %v688 = vmul.f32 %v687, %v686
    %v689 = vmul.f32 0.5, %v688
    %v690 = vsub.f32 1.5, %v689
    %v691 = vmul.f32 %v686, %v690
    %vm692 = vweird.f32 %v684
    %vm693 = vweird.f32 %v686
    %vm694 = vmor %vm692, %vm693
    %v695 = vsel %vm694, %v686, %v691
    %v696 = vrsqrt.pop %v685
    %v697 = vmul.f32 %v696, %v685
    %v698 = vmul.f32 %v697, %v696
    %v699 = vmul.f32 0.5, %v698
    %v700 = vsub.f32 1.5, %v699
    %v701 = vmul.f32 %v696, %v700
    %vm702 = vweird.f32 %v685
    %vm703 = vweird.f32 %v696
    %vm704 = vmor %vm702, %vm703
    %v705 = vsel %vm704, %v696, %v701
    %v706 = vmul.f32 %v670, %v695
    %v707 = vmul.f32 %v671, %v705
    %v709 = vperm.slane %v673, 0
    %v711 = vmul.f32 %v706, %v709
    %v712 = vmul.f32 %v707, %v709
    %v713 = vpack.c.bf16 %v712, %v711
    %s714 = scalar_lea.vmem %s3, 16
    %v715 = vld [vmem:[%s714] sm:$0xf]
    %v716 = vld [vmem:[%s714 + $0x4] sm:$0xf]
    %v717 = vld [vmem:[%s714 + $0x8] sm:$0xf]
    %v718 = vld [vmem:[%s714 + $0xc] sm:$0xf]
    %v723 = vunpack.c.l.b16 %v715
    %v724 = vunpack.c.l.b16 %v716
    %v725 = vunpack.c.l.b16 %v717
    %v726 = vunpack.c.l.b16 %v718
    %v727 = vpack.c.b16 %v724, %v723
    %v728 = vpack.c.b16 %v726, %v725
    %v732 = vsel %vm90, %v713, 0
    %734 = vmatpush.bf16.msra.mxu0 0
    %735 = vmatpush.bf16.msra.mxu0 0
    %736 = vmatpush.bf16.msra.mxu0 0
    %737 = vmatpush.bf16.msra.mxu0 0
    %738 = vmatpush.bf16.msra.mxu0 0
    %739 = vmatpush.bf16.msra.mxu0 0
    %740 = vmatpush.bf16.msra.mxu0 %v728
    %741 = vmatpush.bf16.msra.mxu0 %v727
    %742 = vmatmul.bf16.gmra.mxu0 %v732
    %v743 = vpop.f32.mrf.mxu0
    %v744 = vadd.f32 0.0, %v743
    %v745 = vpop.f32.mrf.mxu0
    %v746 = vadd.f32 0.0, %v745
    %747 = vdwg.mxu0
    %v748 = vmul.f32 %v744, 0.35355338
    %v749 = vmul.f32 %v746, 0.35355338
    %v750 = vpack.c.bf16 %v749, %v748
    %v751 = vpack.c.bf16 %v746, %v744
    %753 = vrot.lane.b32.xlu0 %v751, 96
    %v754 = vpop.permute.xlu0 %753
    %v756 = vsel %vm74, %v750, 0
    %v759 = vsel %vm74, %v754, 0
    %761 = vmatpush.bf16.xpose.msra.mxu0 0
    %762 = vmatpush.bf16.xpose.msra.mxu0 0
    %763 = vmatpush.bf16.xpose.msra.mxu0 0
    %764 = vmatpush.bf16.xpose.msra.mxu0 0
    %765 = vmatpush.bf16.xpose.msra.mxu0 0
    %766 = vmatpush.bf16.xpose.msra.mxu0 0
    %767 = vmatpush.bf16.xpose.msra.mxu0 0
    %768 = vmatpush.bf16.xpose.msra.mxu0 %v759
    %769 = vmatmul.bf16.gmra.mxu0 %v756
    %v770 = vpop.f32.mrf.mxu0
    %v771 = vadd.f32 %v75, %v770
    %v772 = vpop.f32.mrf.mxu0
    %v773 = vadd.f32 %v80, %v772
    %774 = vdwg.mxu0
    %v775 = vmul.f32 %v771, 1.442695
    %v776 = vpow.pop %v775
    %v777 = vmul.f32 %v773, 1.442695
    %v778 = vpow.pop %v777
    %v779 = vsel %vm200, %v776, 0.0
    %780 = vadd.xlane.f32.xlu0 %v779
    %v781 = vpop.xlane.xlu0 %780
    %v782 = vsel %vm200, %v778, 0.0
    %783 = vadd.xlane.f32.xlu0 %v782
    %v784 = vpop.xlane.xlu0 %783
    %v785 = vrcp.pop %v781
    %v786 = vrcp.pop %v784
    %v787 = vmul.f32 %v776, %v785
    %v788 = vmul.f32 %v778, %v786
    %v789 = vpack.c.bf16 %v788, %v787
    %790 = vrot.lane.b32.xlu0 %v751, 64
    %v791 = vpop.permute.xlu0 %790
    %v794 = vsel %vm200, %v789, 0
    %796 = vmatpush.bf16.msra.mxu0 0
    %797 = vmatpush.bf16.msra.mxu0 0
    %798 = vmatpush.bf16.msra.mxu0 0
    %799 = vmatpush.bf16.msra.mxu0 0
    %800 = vmatpush.bf16.msra.mxu0 0
    %801 = vmatpush.bf16.msra.mxu0 0
    %802 = vmatpush.bf16.msra.mxu0 0
    %803 = vmatpush.bf16.msra.mxu0 %v791
    %804 = vmatmul.bf16.gmra.mxu0 %v794
    %v805 = vpop.f32.mrf.mxu0
    %v806 = vadd.f32 0.0, %v805
    %v807 = vpop.f32.mrf.mxu0
    %v808 = vadd.f32 0.0, %v807
    %809 = vdwg.mxu0
    %811 = vrot.lane.b32.xlu0 %v750, 120
    %v812 = vpop.permute.xlu0 %811
    %813 = vrot.lane.b32.xlu0 %v751, 88
    %v814 = vpop.permute.xlu0 %813
    %v816 = vsel %vm74, %v812, 0
    %v819 = vsel %vm74, %v814, 0
    %821 = vmatpush.bf16.xpose.msra.mxu0 0
    %822 = vmatpush.bf16.xpose.msra.mxu0 0
    %823 = vmatpush.bf16.xpose.msra.mxu0 0
    %824 = vmatpush.bf16.xpose.msra.mxu0 0
    %825 = vmatpush.bf16.xpose.msra.mxu0 0
    %826 = vmatpush.bf16.xpose.msra.mxu0 0
    %827 = vmatpush.bf16.xpose.msra.mxu0 0
    %828 = vmatpush.bf16.xpose.msra.mxu0 %v819
    %829 = vmatmul.bf16.gmra.mxu0 %v816
    %v830 = vpop.f32.mrf.mxu0
    %v831 = vadd.f32 %v75, %v830
    %v832 = vpop.f32.mrf.mxu0
    %v833 = vadd.f32 %v80, %v832
    %834 = vdwg.mxu0
    %v835 = vmul.f32 %v831, 1.442695
    %v836 = vpow.pop %v835
    %v837 = vmul.f32 %v833, 1.442695
    %v838 = vpow.pop %v837
    %v839 = vsel %vm200, %v836, 0.0
    %840 = vadd.xlane.f32.xlu0 %v839
    %v841 = vpop.xlane.xlu0 %840
    %v842 = vsel %vm200, %v838, 0.0
    %843 = vadd.xlane.f32.xlu0 %v842
    %v844 = vpop.xlane.xlu0 %843
    %v845 = vrcp.pop %v841
    %v846 = vrcp.pop %v844
    %v847 = vmul.f32 %v836, %v845
    %v848 = vmul.f32 %v838, %v846
    %v849 = vpack.c.bf16 %v848, %v847
    %850 = vrot.lane.b32.xlu0 %v751, 56
    %v851 = vpop.permute.xlu0 %850
    %v854 = vsel %vm200, %v849, 0
    %856 = vmatpush.bf16.msra.mxu0 0
    %857 = vmatpush.bf16.msra.mxu0 0
    %858 = vmatpush.bf16.msra.mxu0 0
    %859 = vmatpush.bf16.msra.mxu0 0
    %860 = vmatpush.bf16.msra.mxu0 0
    %861 = vmatpush.bf16.msra.mxu0 0
    %862 = vmatpush.bf16.msra.mxu0 0
    %863 = vmatpush.bf16.msra.mxu0 %v851
    %864 = vmatmul.bf16.gmra.mxu0 %v854
    %v865 = vpop.f32.mrf.mxu0
    %v866 = vadd.f32 0.0, %v865
    %v867 = vpop.f32.mrf.mxu0
    %v868 = vadd.f32 0.0, %v867
    %869 = vdwg.mxu0
    %870 = vrot.lane.b32.xlu0 %v750, 112
    %v871 = vpop.permute.xlu0 %870
    %872 = vrot.lane.b32.xlu0 %v751, 80
    %v873 = vpop.permute.xlu0 %872
    %v875 = vsel %vm74, %v871, 0
    %v878 = vsel %vm74, %v873, 0
    %880 = vmatpush.bf16.xpose.msra.mxu0 0
    %881 = vmatpush.bf16.xpose.msra.mxu0 0
    %882 = vmatpush.bf16.xpose.msra.mxu0 0
    %883 = vmatpush.bf16.xpose.msra.mxu0 0
    %884 = vmatpush.bf16.xpose.msra.mxu0 0
    %885 = vmatpush.bf16.xpose.msra.mxu0 0
    %886 = vmatpush.bf16.xpose.msra.mxu0 0
    %887 = vmatpush.bf16.xpose.msra.mxu0 %v878
    %888 = vmatmul.bf16.gmra.mxu0 %v875
    %v889 = vpop.f32.mrf.mxu0
    %v890 = vadd.f32 %v75, %v889
    %v891 = vpop.f32.mrf.mxu0
    %v892 = vadd.f32 %v80, %v891
    %893 = vdwg.mxu0
    %v894 = vmul.f32 %v890, 1.442695
    %v895 = vpow.pop %v894
    %v896 = vmul.f32 %v892, 1.442695
    %v897 = vpow.pop %v896
    %v898 = vsel %vm200, %v895, 0.0
    %899 = vadd.xlane.f32.xlu0 %v898
    %v900 = vpop.xlane.xlu0 %899
    %v901 = vsel %vm200, %v897, 0.0
    %902 = vadd.xlane.f32.xlu0 %v901
    %v903 = vpop.xlane.xlu0 %902
    %v904 = vrcp.pop %v900
    %v905 = vrcp.pop %v903
    %v906 = vmul.f32 %v895, %v904
    %v907 = vmul.f32 %v897, %v905
    %v908 = vpack.c.bf16 %v907, %v906
    %909 = vrot.lane.b32.xlu0 %v751, 48
    %v910 = vpop.permute.xlu0 %909
    %v913 = vsel %vm200, %v908, 0
    %915 = vmatpush.bf16.msra.mxu0 0
    %916 = vmatpush.bf16.msra.mxu0 0
    %917 = vmatpush.bf16.msra.mxu0 0
    %918 = vmatpush.bf16.msra.mxu0 0
    %919 = vmatpush.bf16.msra.mxu0 0
    %920 = vmatpush.bf16.msra.mxu0 0
    %921 = vmatpush.bf16.msra.mxu0 0
    %922 = vmatpush.bf16.msra.mxu0 %v910
    %923 = vmatmul.bf16.gmra.mxu0 %v913
    %v924 = vpop.f32.mrf.mxu0
    %v925 = vadd.f32 0.0, %v924
    %v926 = vpop.f32.mrf.mxu0
    %v927 = vadd.f32 0.0, %v926
    %928 = vdwg.mxu0
    %929 = vrot.lane.b32.xlu0 %v750, 104
    %v930 = vpop.permute.xlu0 %929
    %931 = vrot.lane.b32.xlu0 %v751, 72
    %v932 = vpop.permute.xlu0 %931
    %v934 = vsel %vm74, %v930, 0
    %v937 = vsel %vm74, %v932, 0
    %939 = vmatpush.bf16.xpose.msra.mxu0 0
    %940 = vmatpush.bf16.xpose.msra.mxu0 0
    %941 = vmatpush.bf16.xpose.msra.mxu0 0
    %942 = vmatpush.bf16.xpose.msra.mxu0 0
    %943 = vmatpush.bf16.xpose.msra.mxu0 0
    %944 = vmatpush.bf16.xpose.msra.mxu0 0
    %945 = vmatpush.bf16.xpose.msra.mxu0 0
    %946 = vmatpush.bf16.xpose.msra.mxu0 %v937
    %947 = vmatmul.bf16.gmra.mxu0 %v934
    %v948 = vpop.f32.mrf.mxu0
    %v949 = vadd.f32 %v75, %v948
    %v950 = vpop.f32.mrf.mxu0
    %v951 = vadd.f32 %v80, %v950
    %952 = vdwg.mxu0
    %v953 = vmul.f32 %v949, 1.442695
    %v954 = vpow.pop %v953
    %v955 = vmul.f32 %v951, 1.442695
    %v956 = vpow.pop %v955
    %v957 = vsel %vm200, %v954, 0.0
    %958 = vadd.xlane.f32.xlu0 %v957
    %v959 = vpop.xlane.xlu0 %958
    %v960 = vsel %vm200, %v956, 0.0
    %961 = vadd.xlane.f32.xlu0 %v960
    %v962 = vpop.xlane.xlu0 %961
    %v963 = vrcp.pop %v959
    %v964 = vrcp.pop %v962
    %v965 = vmul.f32 %v954, %v963
    %v966 = vmul.f32 %v956, %v964
    %v967 = vpack.c.bf16 %v966, %v965
    %968 = vrot.lane.b32.xlu0 %v751, 40
    %v969 = vpop.permute.xlu0 %968
    %v972 = vsel %vm200, %v967, 0
    %974 = vmatpush.bf16.msra.mxu0 0
    %975 = vmatpush.bf16.msra.mxu0 0
    %976 = vmatpush.bf16.msra.mxu0 0
    %977 = vmatpush.bf16.msra.mxu0 0
    %978 = vmatpush.bf16.msra.mxu0 0
    %979 = vmatpush.bf16.msra.mxu0 0
    %980 = vmatpush.bf16.msra.mxu0 0
    %981 = vmatpush.bf16.msra.mxu0 %v969
    %982 = vmatmul.bf16.gmra.mxu0 %v972
    %v983 = vpop.f32.mrf.mxu0
    %v984 = vadd.f32 0.0, %v983
    %v985 = vpop.f32.mrf.mxu0
    %v986 = vadd.f32 0.0, %v985
    %987 = vdwg.mxu0
    %990 = vrot.lane.b32.xlu0 %v866, 8
    %v991 = vpop.permute.xlu0 %990
    %992 = vrot.lane.b32.xlu0 %v868, 8
    %v993 = vpop.permute.xlu0 %992
    %998 = vrot.lane.b32.xlu0 %v925, 16
    %v999 = vpop.permute.xlu0 %998
    %1000 = vrot.lane.b32.xlu0 %v927, 16
    %v1001 = vpop.permute.xlu0 %1000
    %1006 = vrot.lane.b32.xlu0 %v984, 24
    %v1007 = vpop.permute.xlu0 %1006
    %1008 = vrot.lane.b32.xlu0 %v986, 24
    %v1009 = vpop.permute.xlu0 %1008
    %v1012 = vsel %vm74, %v806, %v991
    %v1013 = vsel %vm74, %v808, %v993
    %v1014 = vsel %vm200, %v1012, %v999
    %v1015 = vsel %vm200, %v1013, %v1001
    %v1016 = vsel %vm438, %v1014, %v1007
    %v1017 = vsel %vm438, %v1015, %v1009
    %v1018 = vpack.c.bf16 %v1017, %v1016
    %s1019 = scalar_lea.vmem %s4, 16
    %v1020 = vld [vmem:[%s1019] sm:$0xf]
    %v1021 = vld [vmem:[%s1019 + $0x4] sm:$0xf]
    %v1022 = vld [vmem:[%s1019 + $0x8] sm:$0xf]
    %v1023 = vld [vmem:[%s1019 + $0xc] sm:$0xf]
    %v1028 = vunpack.c.l.b16 %v1020
    %v1029 = vunpack.c.l.b16 %v1021
    %v1030 = vunpack.c.l.b16 %v1022
    %v1031 = vunpack.c.l.b16 %v1023
    %v1032 = vpack.c.b16 %v1029, %v1028
    %v1033 = vpack.c.b16 %v1031, %v1030
    %v1037 = vsel %vm90, %v1018, 0
    %1039 = vmatpush.bf16.msra.mxu0 0
    %1040 = vmatpush.bf16.msra.mxu0 0
    %1041 = vmatpush.bf16.msra.mxu0 0
    %1042 = vmatpush.bf16.msra.mxu0 0
    %1043 = vmatpush.bf16.msra.mxu0 0
    %1044 = vmatpush.bf16.msra.mxu0 0
    %1045 = vmatpush.bf16.msra.mxu0 %v1033
    %1046 = vmatpush.bf16.msra.mxu0 %v1032
    %1047 = vmatmul.bf16.gmra.mxu0 %v1037
    %v1048 = vpop.f32.mrf.mxu0
    %v1049 = vadd.f32 0.0, %v1048
    %v1050 = vpop.f32.mrf.mxu0
    %v1051 = vadd.f32 0.0, %v1050
    %1052 = vdwg.mxu0
    %v1053 = vadd.f32 %v670, %v1049
    %v1054 = vadd.f32 %v671, %v1051
    %s1055 = scalar_lea.vmem [#allocation4], 1
    %v1056 = vld [vmem:[%s1055] sm:$0x1]
    %v1057 = vmul.f32 %v1053, %v1053
    %v1058 = vmul.f32 %v1054, %v1054
    %v1059 = vsel %vm90, %v1057, 0.0
    %1060 = vadd.xlane.f32.xlu0 %v1059
    %v1061 = vpop.xlane.xlu0 %1060
    %v1062 = vsel %vm90, %v1058, 0.0
    %1063 = vadd.xlane.f32.xlu0 %v1062
    %v1064 = vpop.xlane.xlu0 %1063
    %v1065 = vmul.f32 %v1061, %v103
    %v1066 = vmul.f32 %v1064, %v103
    %v1067 = vadd.f32 %v1065, 1e-05
    %v1068 = vadd.f32 %v1066, 1e-05
    %v1069 = vrsqrt.pop %v1067
    %v1070 = vmul.f32 %v1069, %v1067
    %v1071 = vmul.f32 %v1070, %v1069
    %v1072 = vmul.f32 0.5, %v1071
    %v1073 = vsub.f32 1.5, %v1072
    %v1074 = vmul.f32 %v1069, %v1073
    %vm1075 = vweird.f32 %v1067
    %vm1076 = vweird.f32 %v1069
    %vm1077 = vmor %vm1075, %vm1076
    %v1078 = vsel %vm1077, %v1069, %v1074
    %v1079 = vrsqrt.pop %v1068
    %v1080 = vmul.f32 %v1079, %v1068
    %v1081 = vmul.f32 %v1080, %v1079
    %v1082 = vmul.f32 0.5, %v1081
    %v1083 = vsub.f32 1.5, %v1082
    %v1084 = vmul.f32 %v1079, %v1083
    %vm1085 = vweird.f32 %v1068
    %vm1086 = vweird.f32 %v1079
    %vm1087 = vmor %vm1085, %vm1086
    %v1088 = vsel %vm1087, %v1079, %v1084
    %v1089 = vmul.f32 %v1053, %v1078
    %v1090 = vmul.f32 %v1054, %v1088
    %v1092 = vperm.slane %v1056, 0
    %v1094 = vmul.f32 %v1089, %v1092
    %v1095 = vmul.f32 %v1090, %v1092
    %v1096 = vpack.c.bf16 %v1095, %v1094
    %s1097 = scalar_lea.vmem %s6, 16
    %v1098 = vld [vmem:[%s1097] sm:$0xf]
    %v1099 = vld [vmem:[%s1097 + $0x4] sm:$0xf]
    %v1100 = vld [vmem:[%s1097 + $0x8] sm:$0xf]
    %v1101 = vld [vmem:[%s1097 + $0xc] sm:$0xf]
    %v1106 = vunpack.c.l.b16 %v1098
    %v1107 = vunpack.c.l.b16 %v1099
    %v1108 = vunpack.c.l.b16 %v1100
    %v1109 = vunpack.c.l.b16 %v1101
    %v1110 = vpack.c.b16 %v1107, %v1106
    %v1111 = vpack.c.b16 %v1109, %v1108
    %v1115 = vsel %vm90, %v1096, 0
    %1117 = vmatpush.bf16.msra.mxu0 0
    %1118 = vmatpush.bf16.msra.mxu0 0
    %1119 = vmatpush.bf16.msra.mxu0 0
    %1120 = vmatpush.bf16.msra.mxu0 0
    %1121 = vmatpush.bf16.msra.mxu0 0
    %1122 = vmatpush.bf16.msra.mxu0 0
    %1123 = vmatpush.bf16.msra.mxu0 %v1111
    %1124 = vmatpush.bf16.msra.mxu0 %v1110
    %1125 = vmatmul.bf16.gmra.mxu0 %v1115
    %v1126 = vpop.f32.mrf.mxu0
    %v1127 = vadd.f32 0.0, %v1126
    %v1128 = vpop.f32.mrf.mxu0
    %v1129 = vadd.f32 0.0, %v1128
    %1130 = vdwg.mxu0
    %v1131 = vxor.u32 %v1127, 2147483648
    %v1132 = vxor.u32 %v1129, 2147483648
    %v1133 = vmul.f32 %v1131, 1.442695
    %v1134 = vpow.pop %v1133
    %v1135 = vmul.f32 %v1132, 1.442695
    %v1136 = vpow.pop %v1135
    %v1137 = vadd.f32 %v1134, 1.0
    %v1138 = vadd.f32 %v1136, 1.0
    %v1139 = vrcp.pop %v1137
    %v1140 = vmul.f32 %v1137, %v1139
    %v1141 = vsub.f32 1.0, %v1140
    %v1142 = vmul.f32 %v1139, %v1141
    %v1143 = vadd.f32 %v1139, %v1142
    %vm1144 = vweird.f32 %v1137
    %vm1145 = vweird.f32 %v1139
    %vm1146 = vmor %vm1144, %vm1145
    %v1147 = vsel %vm1146, %v1139, %v1143
    %v1148 = vand.u32 2147483647, %v1137
    %vm1149 = vcmp.eq.f32.partialorder %v1148, 8.507059e+37
    %v1150 = vand.u32 %v1137, 2147483648
    %v1151 = vor.u32 1.1754944e-38, %v1150
    %v1152 = vsel %vm1149, %v1151, %v1147
    %v1153 = vmul.f32 1.0, %v1152
    %v1154 = vrcp.pop %v1138
    %v1155 = vmul.f32 %v1138, %v1154
    %v1156 = vsub.f32 1.0, %v1155
    %v1157 = vmul.f32 %v1154, %v1156
    %v1158 = vadd.f32 %v1154, %v1157
    %vm1159 = vweird.f32 %v1138
    %vm1160 = vweird.f32 %v1154
    %vm1161 = vmor %vm1159, %vm1160
    %v1162 = vsel %vm1161, %v1154, %v1158
    %v1163 = vand.u32 2147483647, %v1138
    %vm1164 = vcmp.eq.f32.partialorder %v1163, 8.507059e+37
    %v1165 = vand.u32 %v1138, 2147483648
    %v1166 = vor.u32 1.1754944e-38, %v1165
    %v1167 = vsel %vm1164, %v1166, %v1162
    %v1168 = vmul.f32 1.0, %v1167
    %v1169 = vmul.f32 %v1127, %v1153
    %v1170 = vmul.f32 %v1129, %v1168
    %v1171 = vpack.c.bf16 %v1170, %v1169
    %s1172 = scalar_lea.vmem %s7, 64
    %v1173 = vld [vmem:[%s1172] sm:$0xf]
    %v1174 = vld [vmem:[%s1172 + $0x4] sm:$0xf]
    %v1175 = vld [vmem:[%s1172 + $0x8] sm:$0xf]
    %v1176 = vld [vmem:[%s1172 + $0xc] sm:$0xf]
    %v1177 = vld [vmem:[%s1172 + $0x10] sm:$0xf]
    %v1178 = vld [vmem:[%s1172 + $0x14] sm:$0xf]
    %v1179 = vld [vmem:[%s1172 + $0x18] sm:$0xf]
    %v1180 = vld [vmem:[%s1172 + $0x1c] sm:$0xf]
    %v1181 = vld [vmem:[%s1172 + $0x20] sm:$0xf]
    %v1182 = vld [vmem:[%s1172 + $0x24] sm:$0xf]
    %v1183 = vld [vmem:[%s1172 + $0x28] sm:$0xf]
    %v1184 = vld [vmem:[%s1172 + $0x2c] sm:$0xf]
    %v1185 = vld [vmem:[%s1172 + $0x30] sm:$0xf]
    %v1186 = vld [vmem:[%s1172 + $0x34] sm:$0xf]
    %v1187 = vld [vmem:[%s1172 + $0x38] sm:$0xf]
    %v1188 = vld [vmem:[%s1172 + $0x3c] sm:$0xf]
    %v1205 = vunpack.c.l.b16 %v1173
    %v1206 = vunpack.c.l.b16 %v1174
    %v1207 = vunpack.c.l.b16 %v1175
    %v1208 = vunpack.c.l.b16 %v1176
    %v1209 = vunpack.c.l.b16 %v1177
    %v1210 = vunpack.c.l.b16 %v1178
    %v1211 = vunpack.c.l.b16 %v1179
    %v1212 = vunpack.c.l.b16 %v1180
    %v1213 = vunpack.c.l.b16 %v1181
    %v1214 = vunpack.c.l.b16 %v1182
    %v1215 = vunpack.c.l.b16 %v1183
    %v1216 = vunpack.c.l.b16 %v1184
    %v1217 = vunpack.c.l.b16 %v1185
    %v1218 = vunpack.c.l.b16 %v1186
    %v1219 = vunpack.c.l.b16 %v1187
    %v1220 = vunpack.c.l.b16 %v1188
    %v1221 = vpack.c.b16 %v1206, %v1205
    %v1222 = vpack.c.b16 %v1208, %v1207
    %v1223 = vpack.c.b16 %v1210, %v1209
    %v1224 = vpack.c.b16 %v1212, %v1211
    %v1225 = vpack.c.b16 %v1214, %v1213
    %v1226 = vpack.c.b16 %v1216, %v1215
    %v1227 = vpack.c.b16 %v1218, %v1217
    %v1228 = vpack.c.b16 %v1220, %v1219
    %1237 = vmatpush.bf16.msra.mxu0 %v1228
    %1238 = vmatpush.bf16.msra.mxu0 %v1227
    %1239 = vmatpush.bf16.msra.mxu0 %v1226
    %1240 = vmatpush.bf16.msra.mxu0 %v1225
    %1241 = vmatpush.bf16.msra.mxu0 %v1224
    %1242 = vmatpush.bf16.msra.mxu0 %v1223
    %1243 = vmatpush.bf16.msra.mxu0 %v1222
    %1244 = vmatpush.bf16.msra.mxu0 %v1221
    %1245 = vmatmul.bf16.gmra.mxu0 %v1171
    %v1246 = vpop.f32.mrf.mxu0
    %v1247 = vadd.f32 0.0, %v1246
    %v1248 = vpop.f32.mrf.mxu0
    %v1249 = vadd.f32 0.0, %v1248
    %1250 = vdwg.mxu0
    %v1251 = vadd.f32 %v1053, %v1247
    %v1252 = vadd.f32 %v1054, %v1249
    %v1253 = vld [vmem:[%s8] sm:$0x1]
    %v1254 = vmul.f32 %v1251, %v1251
    %v1255 = vmul.f32 %v1252, %v1252
    %v1256 = vsel %vm90, %v1254, 0.0
    %1257 = vadd.xlane.f32.xlu0 %v1256
    %v1258 = vpop.xlane.xlu0 %1257
    %v1259 = vsel %vm90, %v1255, 0.0
    %1260 = vadd.xlane.f32.xlu0 %v1259
    %v1261 = vpop.xlane.xlu0 %1260
    %v1262 = vmul.f32 %v1258, %v103
    %v1263 = vmul.f32 %v1261, %v103
    %v1264 = vadd.f32 %v1262, 1e-05
    %v1265 = vadd.f32 %v1263, 1e-05
    %v1266 = vrsqrt.pop %v1264
    %v1267 = vmul.f32 %v1266, %v1264
    %v1268 = vmul.f32 %v1267, %v1266
    %v1269 = vmul.f32 0.5, %v1268
    %v1270 = vsub.f32 1.5, %v1269
    %v1271 = vmul.f32 %v1266, %v1270
    %vm1272 = vweird.f32 %v1264
    %vm1273 = vweird.f32 %v1266
    %vm1274 = vmor %vm1272, %vm1273
    %v1275 = vsel %vm1274, %v1266, %v1271
    %v1276 = vrsqrt.pop %v1265
    %v1277 = vmul.f32 %v1276, %v1265
    %v1278 = vmul.f32 %v1277, %v1276
    %v1279 = vmul.f32 0.5, %v1278
    %v1280 = vsub.f32 1.5, %v1279
    %v1281 = vmul.f32 %v1276, %v1280
    %vm1282 = vweird.f32 %v1265
    %vm1283 = vweird.f32 %v1276
    %vm1284 = vmor %vm1282, %vm1283
    %v1285 = vsel %vm1284, %v1276, %v1281
    %v1286 = vmul.f32 %v1251, %v1275
    %v1287 = vmul.f32 %v1252, %v1285
    %v1289 = vperm.slane %v1253, 0
    %v1291 = vmul.f32 %v1286, %v1289
    %v1292 = vmul.f32 %v1287, %v1289
    %v1293 = vpack.c.bf16 %v1292, %v1291
    %v1294 = vld [vmem:[%s9] sm:$0xff]
    %v1295 = vld [vmem:[%s9 + $0x8] sm:$0xff]
    %v1296 = vld [vmem:[%s9 + $0x10] sm:$0xff]
    %v1297 = vld [vmem:[%s9 + $0x18] sm:$0xff]
    %v1302 = vunpack.c.l.b16 %v1294
    %v1303 = vunpack.c.h.b16 %v1294
    %v1304 = vunpack.c.l.b16 %v1295
    %v1305 = vunpack.c.h.b16 %v1295
    %v1306 = vunpack.c.l.b16 %v1296
    %v1307 = vunpack.c.h.b16 %v1296
    %v1308 = vunpack.c.l.b16 %v1297
    %v1309 = vunpack.c.h.b16 %v1297
    %v1310 = vpack.c.b16 %v1304, %v1302
    %v1311 = vpack.c.b16 %v1305, %v1303
    %v1312 = vpack.c.b16 %v1308, %v1306
    %v1313 = vpack.c.b16 %v1309, %v1307
    %v1319 = vsel %vm90, %v1293, 0
    %1321 = vmatpush.bf16.msra.mxu0 0
    %1322 = vmatpush.bf16.msra.mxu0 0
    %1323 = vmatpush.bf16.msra.mxu0 0
    %1324 = vmatpush.bf16.msra.mxu0 0
    %1325 = vmatpush.bf16.msra.mxu0 0
    %1326 = vmatpush.bf16.msra.mxu0 0
    %1327 = vmatpush.bf16.msra.mxu0 %v1312
    %1328 = vmatpush.bf16.msra.mxu0 %v1310
    %1329 = vmatmul.bf16.gmra.mxu0 %v1319
    %v1330 = vpop.f32.mrf.mxu0
    %v1331 = vadd.f32 0.0, %v1330
    %v1332 = vpop.f32.mrf.mxu0
    %v1333 = vadd.f32 0.0, %v1332
    %1334 = vdwg.mxu0
    %1335 = vmatpush.bf16.msra.mxu0 0
    %1336 = vmatpush.bf16.msra.mxu0 0
    %1337 = vmatpush.bf16.msra.mxu0 0
    %1338 = vmatpush.bf16.msra.mxu0 0
    %1339 = vmatpush.bf16.msra.mxu0 0
    %1340 = vmatpush.bf16.msra.mxu0 0
    %1341 = vmatpush.bf16.msra.mxu0 %v1313
    %1342 = vmatpush.bf16.msra.mxu0 %v1311
    %1343 = vmatmul.bf16.gmra.mxu0 %v1319
    %v1344 = vpop.f32.mrf.mxu0
    %v1345 = vadd.f32 0.0, %v1344
    %v1346 = vpop.f32.mrf.mxu0
    %v1347 = vadd.f32 0.0, %v1346
    %1348 = vdwg.mxu0
    %1349 = vst [vmem:[%s10] sm:$0xff] %v1331
    %1350 = vst [vmem:[%s10 + $0x8] sm:$0xff] %v1345
    %s1351 = scalar_lea.vmem %s10, 16
    %1352 = vst [vmem:[%s1351] sm:$0xff] %v1333
    %1353 = vst [vmem:[%s1351 + $0x8] sm:$0xff] %v1347
    // Predicated region
    $region50: #{temporal_depth_decoder_forward.1} parent=1 // pred_check
      _
    $region51: #{temporal_depth_decoder_forward.1} parent=1 // pred_check_branch
      %1355 = sbr.rel (0) target = $region53
    $region52: #{temporal_depth_decoder_forward.1} parent=1 // pred_region
      _
    $region53: #{temporal_depth_decoder_forward.1} parent=1 // pred_fallthru
      _
    // Predicated region
    $region54: #{temporal_depth_decoder_forward.1} parent=1 // pred_check
      _
    $region55: #{temporal_depth_decoder_forward.1} parent=1 // pred_check_branch
      %1357 = sbr.rel (0) target = $region57
    $region56: #{temporal_depth_decoder_forward.1} parent=1 // pred_region
      _
    $region57: #{temporal_depth_decoder_forward.1} parent=1 // pred_fallthru
      _
    %1358 = vsyncpa [#allocation3], 1
    %1359 = vsyncpa [#allocation5], 1

</llo_original>
